<compile_context>
chip_gen: v6e
topology: v6e:2x2x1
jax: 0.10.0
libtpu: 0.0.40
codegen_flags: <defaults>
</compile_context>

<pallas_src>
import math
import numpy as np
import jax
import jax.numpy as jnp
from jax import lax
from jax.experimental import pallas as pl
from jax.experimental.pallas import tpu as pltpu


def _round_up(x, m):
    return (x + m - 1) // m * m


def _largest_divisor(n, limit, prefer_multiple=8):
    """Largest divisor of n that is <= limit, preferring multiples of prefer_multiple."""
    limit = max(1, min(n, limit))
    best_any = None
    for d in range(limit, 0, -1):
        if n % d == 0:
            if best_any is None:
                best_any = d
            if d % prefer_multiple == 0 or d == n:
                return d
    return best_any


def _make_kernel(*, bt, c_chunk, c_inner, n_inner, C, W, K, D, HW, hw_tile, has_tail):
    PAD = K // 2
    base = D - PAD * W - PAD          # lane offset of the (kh=0, kw=0) conv window

    def kernel(wtab_ref, x_ref, o_ref, p_ref):
        # wtab_ref: VMEM (2*bt, KKP)      packed taps: rows [0:bt]=avg(/C), [bt:2bt]=max
        # x_ref   : VMEM (bt, c_chunk, HW) lane-dense input chunk
        # o_ref   : VMEM (bt, 1, HW)       lane-dense attention map
        # p_ref   : VMEM (2*bt, L)         packed running sum/max, zero-padded flat maps
        c = pl.program_id(1)

        # ---- init packed running maps (interior lives at lane-aligned offset D) ----
        @pl.when(c == 0)
        def _init():
            p_ref[...] = jnp.zeros_like(p_ref)
            p_ref[bt:2 * bt, D:D + HW] = jnp.full((bt, HW), -jnp.inf, jnp.float32)

        # ---- chunked channel reduction on the lane-dense (bt, c, H*W) view ----
        def reduce_subchunk(ci, s, m):
            start = ci * c_inner
            if isinstance(start, int):                     # unrolled python loop
                xc = x_ref[:, start:start + c_inner, :]
            else:                                          # fori_loop (dynamic start)
                xc = x_ref[:, pl.ds(pl.multiple_of(start, c_inner), c_inner), :]
            xc = xc.astype(jnp.float32)
            if has_tail:                                   # mask channels >= C (tail chunk)
                ch = lax.broadcasted_iota(jnp.int32, xc.shape, 1) + (c * c_chunk + start)
                valid = ch < C
                xs = jnp.where(valid, xc, 0.0)
                xm = jnp.where(valid, xc, -jnp.inf)
            else:
                xs = xm = xc
            return s + jnp.sum(xs, axis=1), jnp.maximum(m, jnp.max(xm, axis=1))

        s0 = jnp.zeros((bt, HW), jnp.float32)
        m0 = jnp.full((bt, HW), -jnp.inf, jnp.float32)
        if n_inner <= 8:                                   # short: fully unrolled
            s, m = s0, m0
            for ci in range(n_inner):
                s, m = reduce_subchunk(ci, s, m)
        else:                                              # long: unrolled fori_loop
            def body(ci, carry):
                return reduce_subchunk(ci, *carry)
            try:
                s, m = lax.fori_loop(0, n_inner, body, (s0, m0), unroll=4)
            except TypeError:                              # older jax without unroll kwarg
                s, m = lax.fori_loop(0, n_inner, body, (s0, m0))

        p_ref[0:bt, D:D + HW] += s
        p_ref[bt:2 * bt, D:D + HW] = jnp.maximum(p_ref[bt:2 * bt, D:D + HW], m)

        # ---- last chunk: 7x7 (2->1) conv on the packed padded maps + sigmoid ----
        @pl.when(c == pl.num_programs(1) - 1)
        def _finalize():
            wt = wtab_ref[...]                             # (2*bt, KKP) tap table
            for t0 in range(0, HW, hw_tile):               # lane-aligned HW sub-tiles
                tile = min(hw_tile, HW - t0)
                col = (lax.broadcasted_iota(jnp.int32, (1, tile), 1) + t0) % W
                acc = jnp.zeros((2 * bt, tile), jnp.float32)
                for kw in range(K):
                    mk = ((col >= PAD - kw) & (col < W + PAD - kw)).astype(jnp.float32)
                    part0 = jnp.zeros((2 * bt, tile), jnp.float32)
                    part1 = jnp.zeros((2 * bt, tile), jnp.float32)
                    for kh in range(K):
                        off = base + t0 + kh * W + kw      # static lane offset
                        slab = p_ref[:, off:off + tile]    # ONE shifted slice: avg + max
                        j = kh * K + kw
                        wcol = wt[:, j:j + 1]              # (2*bt, 1) per-sublane taps
                        if kh % 2 == 0:
                            part0 = part0 + wcol * slab
                        else:
                            part1 = part1 + wcol * slab
                    acc = acc + mk * (part0 + part1)
                y = acc[0:bt, :] + acc[bt:2 * bt, :]       # fold avg-half + max-half
                o_ref[:, 0, t0:t0 + tile] = jax.nn.sigmoid(y).astype(o_ref.dtype)

    return kernel


def spatial_attention(x, weight, *, bt=None, block_bytes=None,
                      inner_bytes=128 << 10, hw_tile=512):
    """x: (B, C, H, W); weight: (1, 2, K, K) with K in (3, 7) -> (B, 1, H, W)."""
    B, C, H, W = x.shape
    O, I, K, K2 = weight.shape
    assert O == 1 and I == 2 and K == K2 and K in (3, 7)
    PAD = K // 2
    HW = H * W
    KK = K * K
    itemsize = jnp.dtype(x.dtype).itemsize

    # ---- generation-aware defaults ----------------------------------------------
    try:
        info = pltpu.get_tpu_info()
        vmem_cap = int(getattr(info, "vmem_capacity_bytes", 64 << 20))
    except Exception:
        vmem_cap = 64 << 20                    # conservative: v7x per-core VMEM
    if block_bytes is None:
        # 128 MiB parts (v5e/v6e) stream bigger chunks; 64 MiB parts (v7x) stay at 8 MiB.
        block_bytes = (16 << 20) if vmem_cap >= (100 << 20) else (8 << 20)

    # ---- batch tiling: fill the 8 sublanes ---------------------------------------
    if bt is None:
        bt = _largest_divisor(B, min(B, 8), prefer_multiple=8)
    assert B % bt == 0

    # ---- channel tiling (dtype-aware, multiple of 8, cdiv grid + masked tail) ----
    row_bytes = bt * HW * itemsize
    target_c = max(1, block_bytes // row_bytes)
    if target_c >= C:
        c_chunk = C
    elif target_c >= 8:
        c_chunk = (target_c // 8) * 8
    else:
        c_chunk = target_c
    nc = pl.cdiv(C, c_chunk)
    has_tail = (C % c_chunk) != 0
    c_inner = _largest_divisor(c_chunk, max(1, inner_bytes // row_bytes), prefer_multiple=8)
    n_inner = c_chunk // c_inner

    # ---- flat padded-map layout (interior at lane-aligned offset D) --------------
    D = _round_up(PAD * W + PAD, 128)
    L = _round_up(D + HW + PAD * W + PAD, 128)

    # Lane-dense view of the input (free reshape, no HBM copy).
    x3 = x.reshape(B, C, HW)

    # Packed tap table: rows [0:bt] = avg taps pre-scaled by 1/C, rows [bt:2bt] = max taps.
    w_avg = weight[0, 0].reshape(-1).astype(jnp.float32) / C
    w_max = weight[0, 1].reshape(-1).astype(jnp.float32)
    KKP = _round_up(KK, 128)
    wtab = jnp.zeros((2 * bt, KKP), jnp.float32)
    wtab = wtab.at[0:bt, 0:KK].set(jnp.broadcast_to(w_avg, (bt, KK)))
    wtab = wtab.at[bt:2 * bt, 0:KK].set(jnp.broadcast_to(w_max, (bt, KK)))

    kernel = _make_kernel(bt=bt, c_chunk=c_chunk, c_inner=c_inner, n_inner=n_inner,
                          C=C, W=W, K=K, D=D, HW=HW,
                          hw_tile=max(128, hw_tile), has_tail=has_tail)

    # ---- input pipelining: 3 buffers hide the finalize bubble when nc > 1 --------
    x_block = (bt, c_chunk, HW)
    x_index_map = lambda b, c: (b, c, 0)
    n_buf = 2
    if nc > 1:
        try:
            x_spec = pl.BlockSpec(x_block, x_index_map, pipeline_mode=pl.Buffered(3))
            n_buf = 3
        except TypeError:
            x_spec = pl.BlockSpec(x_block, x_index_map)
    else:
        x_spec = pl.BlockSpec(x_block, x_index_map)

    # ---- VMEM limit from the actual footprint (never the whole physical VMEM) ----
    in_bytes = n_buf * bt * c_chunk * HW * itemsize
    out_bytes = 2 * bt * HW * itemsize
    scratch_bytes = 2 * bt * L * 4
    wtab_bytes = 2 * (2 * bt) * KKP * 4
    footprint = in_bytes + out_bytes + scratch_bytes + wtab_bytes
    vmem_limit = max(int(footprint * 1.3) + (2 << 20), 16 << 20)
    vmem_limit = min(vmem_limit, (vmem_cap * 3) // 4)
    vmem_limit = max(vmem_limit, footprint + (1 << 20))

    out3 = pl.pallas_call(
        kernel,
        out_shape=jax.ShapeDtypeStruct((B, 1, HW), x.dtype),
        grid=(B // bt, nc),
        in_specs=[
            pl.BlockSpec((2 * bt, KKP), lambda b, c: (0, 0)),   # packed conv taps
            x_spec,                                             # streamed input chunk
        ],
        out_specs=pl.BlockSpec((bt, 1, HW), lambda b, c: (b, 0, 0)),
        scratch_shapes=[
            pltpu.VMEM((2 * bt, L), jnp.float32),  # packed running sum/max (padded, flat)
        ],
        compiler_params=pltpu.CompilerParams(
            dimension_semantics=("parallel", "arbitrary"),
            vmem_limit_bytes=int(vmem_limit)),
    )(wtab, x3)

    return out3.reshape(B, 1, H, W)


def spatial_attention_reference(x, weight):
    K = weight.shape[-1]
    pad = K // 2
    avg = jnp.mean(x, axis=1, keepdims=True)
    mx = jnp.max(x, axis=1, keepdims=True)
    xc = jnp.concatenate([avg, mx], axis=1)
    y = lax.conv_general_dilated(
        xc, weight, window_strides=(1, 1),
        padding=[(pad, pad), (pad, pad)],
        dimension_numbers=("NCHW", "OIHW", "NCHW"),
        precision=lax.Precision.HIGHEST)
    return jax.nn.sigmoid(y)


if __name__ == "__main__":
    key = jax.random.PRNGKey(0)
    k_x, k_w = jax.random.split(key)

    B, C, H, W = 2, 4, 16, 16
    KSIZE = 7
    x = jax.random.normal(k_x, (B, C, H, W), dtype=jnp.float32)

    # PyTorch Conv2d default init: U(-1/sqrt(fan_in), +1/sqrt(fan_in)).
    fan_in = 2 * KSIZE * KSIZE
    bound = 1.0 / math.sqrt(fan_in)
    weight = jax.random.uniform(k_w, (1, 2, KSIZE, KSIZE),
                                dtype=jnp.float32, minval=-bound, maxval=bound)

    out = jax.block_until_ready(spatial_attention(x, weight))
    ref = jax.block_until_ready(spatial_attention_reference(x, weight))

    assert out.shape == (B, 1, H, W)
    np.testing.assert_allclose(np.asarray(out), np.asarray(ref),
                               rtol=1e-5, atol=1e-5)
    print("KERNEL_OK")
</pallas_src>

<mosaic_0001>
module attributes {stable_mosaic.version = 11 : i64} {
  func.func @kernel(%arg0: i32, %arg1: i32, %arg2: memref<4x128xf32, #tpu.memory_space<vmem>>, %arg3: memref<2x4x256xf32, #tpu.memory_space<vmem>>, %arg4: memref<2x1x256xf32, #tpu.memory_space<vmem>>, %arg5: memref<4x512xf32, #tpu.memory_space<vmem>>) attributes {dimension_semantics = [#tpu.dimension_semantics<parallel>, #tpu.dimension_semantics<arbitrary>], iteration_bounds = array<i64: 1, 1>, scalar_prefetch = 0 : i64, scratch_operands = 1 : i64, tpu.core_type = #tpu.core_type<tc>, window_params = [{pipeline_mode = #tpu.pipeline_mode<synchronous>, transform_indices = @transform_0, window_bounds = array<i64: 4, 128>}, {transform_indices = @transform_1, window_bounds = array<i64: 2, 4, 256>}, {transform_indices = @transform_2, window_bounds = array<i64: 2, 1, 256>}]} {
    %c0_i32 = arith.constant 0 : i32
    %0 = arith.cmpi eq, %arg1, %c0_i32 : i32
    %1 = arith.extui %0 : i1 to i32
    %c0_i32_0 = arith.constant 0 : i32
    %2 = arith.cmpi ne, %1, %c0_i32_0 : i32
    scf.if %2 {
      %cst_14 = arith.constant 0.000000e+00 : f32
      %19 = vector.broadcast %cst_14 : f32 to vector<4x512xf32>
      %c0_15 = arith.constant 0 : index
      %c0_16 = arith.constant 0 : index
      %20 = vector.load %arg5[%c0_15, %c0_16] : memref<4x512xf32, #tpu.memory_space<vmem>>, vector<4x512xf32>
      tpu.vector_store %arg5[%c0_15, %c0_16], %19 {strides = array<i32>} : memref<4x512xf32, #tpu.memory_space<vmem>>, vector<4x512xf32>,
      %cst_17 = arith.constant 0xFF800000 : f32
      %21 = vector.broadcast %cst_17 : f32 to vector<2x256xf32>
      %c2_18 = arith.constant 2 : index
      %c128_19 = arith.constant 128 : index
      %22 = vector.load %arg5[%c2_18, %c128_19] : memref<4x512xf32, #tpu.memory_space<vmem>>, vector<2x256xf32>
      tpu.vector_store %arg5[%c2_18, %c128_19], %21 {strides = array<i32>} : memref<4x512xf32, #tpu.memory_space<vmem>>, vector<2x256xf32>,
    } else {
    }
    %cst = arith.constant 0.000000e+00 : f32
    %3 = vector.broadcast %cst : f32 to vector<2x256xf32>
    %cst_1 = arith.constant 0xFF800000 : f32
    %4 = vector.broadcast %cst_1 : f32 to vector<2x256xf32>
    %c0 = arith.constant 0 : index
    %c0_2 = arith.constant 0 : index
    %c0_3 = arith.constant 0 : index
    %5 = vector.load %arg3[%c0, %c0_2, %c0_3] : memref<2x4x256xf32, #tpu.memory_space<vmem>>, vector<2x4x256xf32>
    %cst_4 = arith.constant dense<0.000000e+00> : vector<2x256xf32>
    %6 = vector.multi_reduction <add>, %5, %cst_4 [1] : vector<2x4x256xf32> to vector<2x256xf32>
    %7 = arith.addf %3, %6 : vector<2x256xf32>
    %cst_5 = arith.constant dense<0xFF800000> : vector<2x256xf32>
    %8 = vector.multi_reduction <maximumf>, %5, %cst_5 [1] : vector<2x4x256xf32> to vector<2x256xf32>
    %9 = arith.maximumf %4, %8 : vector<2x256xf32>
    %c0_6 = arith.constant 0 : index
    %c128 = arith.constant 128 : index
    %10 = vector.load %arg5[%c0_6, %c128] : memref<4x512xf32, #tpu.memory_space<vmem>>, vector<2x256xf32>
    %11 = arith.addf %10, %7 : vector<2x256xf32>
    %c0_7 = arith.constant 0 : index
    %c128_8 = arith.constant 128 : index
    %12 = vector.load %arg5[%c0_7, %c128_8] : memref<4x512xf32, #tpu.memory_space<vmem>>, vector<2x256xf32>
    tpu.vector_store %arg5[%c0_7, %c128_8], %11 {strides = array<i32>} : memref<4x512xf32, #tpu.memory_space<vmem>>, vector<2x256xf32>,
    %c2 = arith.constant 2 : index
    %c128_9 = arith.constant 128 : index
    %13 = vector.load %arg5[%c2, %c128_9] : memref<4x512xf32, #tpu.memory_space<vmem>>, vector<2x256xf32>
    %14 = arith.maximumf %13, %9 : vector<2x256xf32>
    %c2_10 = arith.constant 2 : index
    %c128_11 = arith.constant 128 : index
    %15 = vector.load %arg5[%c2_10, %c128_11] : memref<4x512xf32, #tpu.memory_space<vmem>>, vector<2x256xf32>
    tpu.vector_store %arg5[%c2_10, %c128_11], %14 {strides = array<i32>} : memref<4x512xf32, #tpu.memory_space<vmem>>, vector<2x256xf32>,
    %c0_i32_12 = arith.constant 0 : i32
    %16 = arith.cmpi eq, %arg1, %c0_i32_12 : i32
    %17 = arith.extui %16 : i1 to i32
    %c0_i32_13 = arith.constant 0 : i32
    %18 = arith.cmpi ne, %17, %c0_i32_13 : i32
    scf.if %18 {
      %c0_14 = arith.constant 0 : index
      %c0_15 = arith.constant 0 : index
      %19 = vector.load %arg2[%c0_14, %c0_15] : memref<4x128xf32, #tpu.memory_space<vmem>>, vector<4x128xf32>
      %20 = tpu.iota {dimensions = array<i32: 1>} : vector<1x256xi32>
      %c0_i32_16 = arith.constant 0 : i32
      %21 = vector.broadcast %c0_i32_16 : i32 to vector<1x256xi32>
      %22 = arith.addi %20, %21 : vector<1x256xi32>
      %c16_i32 = arith.constant 16 : i32
      %c0_i32_17 = arith.constant 0 : i32
      %23 = arith.cmpi eq, %c16_i32, %c0_i32_17 : i32
      %c1_i32 = arith.constant 1 : i32
      %24 = arith.select %23, %c1_i32, %c16_i32 : i32
      %25 = vector.broadcast %24 : i32 to vector<1x256xi32>
      %26 = arith.remsi %22, %25 : vector<1x256xi32>
      %c0_i32_18 = arith.constant 0 : i32
      %27 = vector.broadcast %c0_i32_18 : i32 to vector<1x256xi32>
      %28 = arith.cmpi ne, %26, %27 : vector<1x256xi32>
      %c0_i32_19 = arith.constant 0 : i32
      %29 = vector.broadcast %c0_i32_19 : i32 to vector<1x256xi32>
      %30 = arith.cmpi slt, %26, %29 : vector<1x256xi32>
      %c0_i32_20 = arith.constant 0 : i32
      %31 = arith.cmpi slt, %24, %c0_i32_20 : i32
      %32 = vector.broadcast %31 : i1 to vector<1x256xi1>
      %33 = vector.broadcast %32 : vector<1x256xi1> to vector<1x256xi1>
      %34 = arith.xori %30, %33 : vector<1x256xi1>
      %35 = arith.andi %34, %28 : vector<1x256xi1>
      %36 = vector.broadcast %24 : i32 to vector<1x256xi32>
      %37 = arith.addi %26, %36 : vector<1x256xi32>
      %38 = arith.select %35, %37, %26 : vector<1x256xi1>, vector<1x256xi32>
      %cst_21 = arith.constant 0.000000e+00 : f32
      %39 = vector.broadcast %cst_21 : f32 to vector<4x256xf32>
      %c3_i32 = arith.constant 3 : i32
      %40 = vector.broadcast %c3_i32 : i32 to vector<1x256xi32>
      %41 = arith.cmpi sge, %38, %40 : vector<1x256xi32>
      %c19_i32 = arith.constant 19 : i32
      %42 = vector.broadcast %c19_i32 : i32 to vector<1x256xi32>
      %43 = arith.cmpi slt, %38, %42 : vector<1x256xi32>
      %44 = arith.andi %41, %43 : vector<1x256xi1>
      %45 = arith.extui %44 : vector<1x256xi1> to vector<1x256xi32>
      %46 = arith.sitofp %45 : vector<1x256xi32> to vector<1x256xf32>
      %cst_22 = arith.constant 0.000000e+00 : f32
      %47 = vector.broadcast %cst_22 : f32 to vector<4x256xf32>
      %cst_23 = arith.constant 0.000000e+00 : f32
      %48 = vector.broadcast %cst_23 : f32 to vector<4x256xf32>
      %c0_24 = arith.constant 0 : index
      %c77 = arith.constant 77 : index
      %49 = vector.load %arg5[%c0_24, %c77] : memref<4x512xf32, #tpu.memory_space<vmem>>, vector<4x256xf32>
      %50 = vector.extract_strided_slice %19 {offsets = [0, 0], sizes = [4, 1], strides = [1, 1]} : vector<4x128xf32> to vector<4x1xf32>
      %51 = vector.broadcast %50 : vector<4x1xf32> to vector<4x256xf32>
      %52 = arith.mulf %51, %49 : vector<4x256xf32>
      %53 = arith.addf %47, %52 : vector<4x256xf32>
      %c0_25 = arith.constant 0 : index
      %c93 = arith.constant 93 : index
      %54 = vector.load %arg5[%c0_25, %c93] : memref<4x512xf32, #tpu.memory_space<vmem>>, vector<4x256xf32>
      %55 = vector.extract_strided_slice %19 {offsets = [0, 7], sizes = [4, 1], strides = [1, 1]} : vector<4x128xf32> to vector<4x1xf32>
      %56 = vector.broadcast %55 : vector<4x1xf32> to vector<4x256xf32>
      %57 = arith.mulf %56, %54 : vector<4x256xf32>
      %58 = arith.addf %48, %57 : vector<4x256xf32>
      %c0_26 = arith.constant 0 : index
      %c109 = arith.constant 109 : index
      %59 = vector.load %arg5[%c0_26, %c109] : memref<4x512xf32, #tpu.memory_space<vmem>>, vector<4x256xf32>
      %60 = vector.extract_strided_slice %19 {offsets = [0, 14], sizes = [4, 1], strides = [1, 1]} : vector<4x128xf32> to vector<4x1xf32>
      %61 = vector.broadcast %60 : vector<4x1xf32> to vector<4x256xf32>
      %62 = arith.mulf %61, %59 : vector<4x256xf32>
      %63 = arith.addf %53, %62 : vector<4x256xf32>
      %c0_27 = arith.constant 0 : index
      %c125 = arith.constant 125 : index
      %64 = vector.load %arg5[%c0_27, %c125] : memref<4x512xf32, #tpu.memory_space<vmem>>, vector<4x256xf32>
      %65 = vector.extract_strided_slice %19 {offsets = [0, 21], sizes = [4, 1], strides = [1, 1]} : vector<4x128xf32> to vector<4x1xf32>
      %66 = vector.broadcast %65 : vector<4x1xf32> to vector<4x256xf32>
      %67 = arith.mulf %66, %64 : vector<4x256xf32>
      %68 = arith.addf %58, %67 : vector<4x256xf32>
      %c0_28 = arith.constant 0 : index
      %c141 = arith.constant 141 : index
      %69 = vector.load %arg5[%c0_28, %c141] : memref<4x512xf32, #tpu.memory_space<vmem>>, vector<4x256xf32>
      %70 = vector.extract_strided_slice %19 {offsets = [0, 28], sizes = [4, 1], strides = [1, 1]} : vector<4x128xf32> to vector<4x1xf32>
      %71 = vector.broadcast %70 : vector<4x1xf32> to vector<4x256xf32>
      %72 = arith.mulf %71, %69 : vector<4x256xf32>
      %73 = arith.addf %63, %72 : vector<4x256xf32>
      %c0_29 = arith.constant 0 : index
      %c157 = arith.constant 157 : index
      %74 = vector.load %arg5[%c0_29, %c157] : memref<4x512xf32, #tpu.memory_space<vmem>>, vector<4x256xf32>
      %75 = vector.extract_strided_slice %19 {offsets = [0, 35], sizes = [4, 1], strides = [1, 1]} : vector<4x128xf32> to vector<4x1xf32>
      %76 = vector.broadcast %75 : vector<4x1xf32> to vector<4x256xf32>
      %77 = arith.mulf %76, %74 : vector<4x256xf32>
      %78 = arith.addf %68, %77 : vector<4x256xf32>
      %c0_30 = arith.constant 0 : index
      %c173 = arith.constant 173 : index
      %79 = vector.load %arg5[%c0_30, %c173] : memref<4x512xf32, #tpu.memory_space<vmem>>, vector<4x256xf32>
      %80 = vector.extract_strided_slice %19 {offsets = [0, 42], sizes = [4, 1], strides = [1, 1]} : vector<4x128xf32> to vector<4x1xf32>
      %81 = vector.broadcast %80 : vector<4x1xf32> to vector<4x256xf32>
      %82 = arith.mulf %81, %79 : vector<4x256xf32>
      %83 = arith.addf %73, %82 : vector<4x256xf32>
      %84 = arith.addf %83, %78 : vector<4x256xf32>
      %85 = vector.broadcast %46 : vector<1x256xf32> to vector<4x256xf32>
      %86 = arith.mulf %85, %84 : vector<4x256xf32>
      %87 = arith.addf %39, %86 : vector<4x256xf32>
      %c2_i32 = arith.constant 2 : i32
      %88 = vector.broadcast %c2_i32 : i32 to vector<1x256xi32>
      %89 = arith.cmpi sge, %38, %88 : vector<1x256xi32>
      %c18_i32 = arith.constant 18 : i32
      %90 = vector.broadcast %c18_i32 : i32 to vector<1x256xi32>
      %91 = arith.cmpi slt, %38, %90 : vector<1x256xi32>
      %92 = arith.andi %89, %91 : vector<1x256xi1>
      %93 = arith.extui %92 : vector<1x256xi1> to vector<1x256xi32>
      %94 = arith.sitofp %93 : vector<1x256xi32> to vector<1x256xf32>
      %cst_31 = arith.constant 0.000000e+00 : f32
      %95 = vector.broadcast %cst_31 : f32 to vector<4x256xf32>
      %cst_32 = arith.constant 0.000000e+00 : f32
      %96 = vector.broadcast %cst_32 : f32 to vector<4x256xf32>
      %c0_33 = arith.constant 0 : index
      %c78 = arith.constant 78 : index
      %97 = vector.load %arg5[%c0_33, %c78] : memref<4x512xf32, #tpu.memory_space<vmem>>, vector<4x256xf32>
      %98 = vector.extract_strided_slice %19 {offsets = [0, 1], sizes = [4, 1], strides = [1, 1]} : vector<4x128xf32> to vector<4x1xf32>
      %99 = vector.broadcast %98 : vector<4x1xf32> to vector<4x256xf32>
      %100 = arith.mulf %99, %97 : vector<4x256xf32>
      %101 = arith.addf %95, %100 : vector<4x256xf32>
      %c0_34 = arith.constant 0 : index
      %c94 = arith.constant 94 : index
      %102 = vector.load %arg5[%c0_34, %c94] : memref<4x512xf32, #tpu.memory_space<vmem>>, vector<4x256xf32>
      %103 = vector.extract_strided_slice %19 {offsets = [0, 8], sizes = [4, 1], strides = [1, 1]} : vector<4x128xf32> to vector<4x1xf32>
      %104 = vector.broadcast %103 : vector<4x1xf32> to vector<4x256xf32>
      %105 = arith.mulf %104, %102 : vector<4x256xf32>
      %106 = arith.addf %96, %105 : vector<4x256xf32>
      %c0_35 = arith.constant 0 : index
      %c110 = arith.constant 110 : index
      %107 = vector.load %arg5[%c0_35, %c110] : memref<4x512xf32, #tpu.memory_space<vmem>>, vector<4x256xf32>
      %108 = vector.extract_strided_slice %19 {offsets = [0, 15], sizes = [4, 1], strides = [1, 1]} : vector<4x128xf32> to vector<4x1xf32>
      %109 = vector.broadcast %108 : vector<4x1xf32> to vector<4x256xf32>
      %110 = arith.mulf %109, %107 : vector<4x256xf32>
      %111 = arith.addf %101, %110 : vector<4x256xf32>
      %c0_36 = arith.constant 0 : index
      %c126 = arith.constant 126 : index
      %112 = vector.load %arg5[%c0_36, %c126] : memref<4x512xf32, #tpu.memory_space<vmem>>, vector<4x256xf32>
      %113 = vector.extract_strided_slice %19 {offsets = [0, 22], sizes = [4, 1], strides = [1, 1]} : vector<4x128xf32> to vector<4x1xf32>
      %114 = vector.broadcast %113 : vector<4x1xf32> to vector<4x256xf32>
      %115 = arith.mulf %114, %112 : vector<4x256xf32>
      %116 = arith.addf %106, %115 : vector<4x256xf32>
      %c0_37 = arith.constant 0 : index
      %c142 = arith.constant 142 : index
      %117 = vector.load %arg5[%c0_37, %c142] : memref<4x512xf32, #tpu.memory_space<vmem>>, vector<4x256xf32>
      %118 = vector.extract_strided_slice %19 {offsets = [0, 29], sizes = [4, 1], strides = [1, 1]} : vector<4x128xf32> to vector<4x1xf32>
      %119 = vector.broadcast %118 : vector<4x1xf32> to vector<4x256xf32>
      %120 = arith.mulf %119, %117 : vector<4x256xf32>
      %121 = arith.addf %111, %120 : vector<4x256xf32>
      %c0_38 = arith.constant 0 : index
      %c158 = arith.constant 158 : index
      %122 = vector.load %arg5[%c0_38, %c158] : memref<4x512xf32, #tpu.memory_space<vmem>>, vector<4x256xf32>
      %123 = vector.extract_strided_slice %19 {offsets = [0, 36], sizes = [4, 1], strides = [1, 1]} : vector<4x128xf32> to vector<4x1xf32>
      %124 = vector.broadcast %123 : vector<4x1xf32> to vector<4x256xf32>
      %125 = arith.mulf %124, %122 : vector<4x256xf32>
      %126 = arith.addf %116, %125 : vector<4x256xf32>
      %c0_39 = arith.constant 0 : index
      %c174 = arith.constant 174 : index
      %127 = vector.load %arg5[%c0_39, %c174] : memref<4x512xf32, #tpu.memory_space<vmem>>, vector<4x256xf32>
      %128 = vector.extract_strided_slice %19 {offsets = [0, 43], sizes = [4, 1], strides = [1, 1]} : vector<4x128xf32> to vector<4x1xf32>
      %129 = vector.broadcast %128 : vector<4x1xf32> to vector<4x256xf32>
      %130 = arith.mulf %129, %127 : vector<4x256xf32>
      %131 = arith.addf %121, %130 : vector<4x256xf32>
      %132 = arith.addf %131, %126 : vector<4x256xf32>
      %133 = vector.broadcast %94 : vector<1x256xf32> to vector<4x256xf32>
      %134 = arith.mulf %133, %132 : vector<4x256xf32>
      %135 = arith.addf %87, %134 : vector<4x256xf32>
      %c1_i32_40 = arith.constant 1 : i32
      %136 = vector.broadcast %c1_i32_40 : i32 to vector<1x256xi32>
      %137 = arith.cmpi sge, %38, %136 : vector<1x256xi32>
      %c17_i32 = arith.constant 17 : i32
      %138 = vector.broadcast %c17_i32 : i32 to vector<1x256xi32>
      %139 = arith.cmpi slt, %38, %138 : vector<1x256xi32>
      %140 = arith.andi %137, %139 : vector<1x256xi1>
      %141 = arith.extui %140 : vector<1x256xi1> to vector<1x256xi32>
      %142 = arith.sitofp %141 : vector<1x256xi32> to vector<1x256xf32>
      %cst_41 = arith.constant 0.000000e+00 : f32
      %143 = vector.broadcast %cst_41 : f32 to vector<4x256xf32>
      %cst_42 = arith.constant 0.000000e+00 : f32
      %144 = vector.broadcast %cst_42 : f32 to vector<4x256xf32>
      %c0_43 = arith.constant 0 : index
      %c79 = arith.constant 79 : index
      %145 = vector.load %arg5[%c0_43, %c79] : memref<4x512xf32, #tpu.memory_space<vmem>>, vector<4x256xf32>
      %146 = vector.extract_strided_slice %19 {offsets = [0, 2], sizes = [4, 1], strides = [1, 1]} : vector<4x128xf32> to vector<4x1xf32>
      %147 = vector.broadcast %146 : vector<4x1xf32> to vector<4x256xf32>
      %148 = arith.mulf %147, %145 : vector<4x256xf32>
      %149 = arith.addf %143, %148 : vector<4x256xf32>
      %c0_44 = arith.constant 0 : index
      %c95 = arith.constant 95 : index
      %150 = vector.load %arg5[%c0_44, %c95] : memref<4x512xf32, #tpu.memory_space<vmem>>, vector<4x256xf32>
      %151 = vector.extract_strided_slice %19 {offsets = [0, 9], sizes = [4, 1], strides = [1, 1]} : vector<4x128xf32> to vector<4x1xf32>
      %152 = vector.broadcast %151 : vector<4x1xf32> to vector<4x256xf32>
      %153 = arith.mulf %152, %150 : vector<4x256xf32>
      %154 = arith.addf %144, %153 : vector<4x256xf32>
      %c0_45 = arith.constant 0 : index
      %c111 = arith.constant 111 : index
      %155 = vector.load %arg5[%c0_45, %c111] : memref<4x512xf32, #tpu.memory_space<vmem>>, vector<4x256xf32>
      %156 = vector.extract_strided_slice %19 {offsets = [0, 16], sizes = [4, 1], strides = [1, 1]} : vector<4x128xf32> to vector<4x1xf32>
      %157 = vector.broadcast %156 : vector<4x1xf32> to vector<4x256xf32>
      %158 = arith.mulf %157, %155 : vector<4x256xf32>
      %159 = arith.addf %149, %158 : vector<4x256xf32>
      %c0_46 = arith.constant 0 : index
      %c127 = arith.constant 127 : index
      %160 = vector.load %arg5[%c0_46, %c127] : memref<4x512xf32, #tpu.memory_space<vmem>>, vector<4x256xf32>
      %161 = vector.extract_strided_slice %19 {offsets = [0, 23], sizes = [4, 1], strides = [1, 1]} : vector<4x128xf32> to vector<4x1xf32>
      %162 = vector.broadcast %161 : vector<4x1xf32> to vector<4x256xf32>
      %163 = arith.mulf %162, %160 : vector<4x256xf32>
      %164 = arith.addf %154, %163 : vector<4x256xf32>
      %c0_47 = arith.constant 0 : index
      %c143 = arith.constant 143 : index
      %165 = vector.load %arg5[%c0_47, %c143] : memref<4x512xf32, #tpu.memory_space<vmem>>, vector<4x256xf32>
      %166 = vector.extract_strided_slice %19 {offsets = [0, 30], sizes = [4, 1], strides = [1, 1]} : vector<4x128xf32> to vector<4x1xf32>
      %167 = vector.broadcast %166 : vector<4x1xf32> to vector<4x256xf32>
      %168 = arith.mulf %167, %165 : vector<4x256xf32>
      %169 = arith.addf %159, %168 : vector<4x256xf32>
      %c0_48 = arith.constant 0 : index
      %c159 = arith.constant 159 : index
      %170 = vector.load %arg5[%c0_48, %c159] : memref<4x512xf32, #tpu.memory_space<vmem>>, vector<4x256xf32>
      %171 = vector.extract_strided_slice %19 {offsets = [0, 37], sizes = [4, 1], strides = [1, 1]} : vector<4x128xf32> to vector<4x1xf32>
      %172 = vector.broadcast %171 : vector<4x1xf32> to vector<4x256xf32>
      %173 = arith.mulf %172, %170 : vector<4x256xf32>
      %174 = arith.addf %164, %173 : vector<4x256xf32>
      %c0_49 = arith.constant 0 : index
      %c175 = arith.constant 175 : index
      %175 = vector.load %arg5[%c0_49, %c175] : memref<4x512xf32, #tpu.memory_space<vmem>>, vector<4x256xf32>
      %176 = vector.extract_strided_slice %19 {offsets = [0, 44], sizes = [4, 1], strides = [1, 1]} : vector<4x128xf32> to vector<4x1xf32>
      %177 = vector.broadcast %176 : vector<4x1xf32> to vector<4x256xf32>
      %178 = arith.mulf %177, %175 : vector<4x256xf32>
      %179 = arith.addf %169, %178 : vector<4x256xf32>
      %180 = arith.addf %179, %174 : vector<4x256xf32>
      %181 = vector.broadcast %142 : vector<1x256xf32> to vector<4x256xf32>
      %182 = arith.mulf %181, %180 : vector<4x256xf32>
      %183 = arith.addf %135, %182 : vector<4x256xf32>
      %c0_i32_50 = arith.constant 0 : i32
      %184 = vector.broadcast %c0_i32_50 : i32 to vector<1x256xi32>
      %185 = arith.cmpi sge, %38, %184 : vector<1x256xi32>
      %c16_i32_51 = arith.constant 16 : i32
      %186 = vector.broadcast %c16_i32_51 : i32 to vector<1x256xi32>
      %187 = arith.cmpi slt, %38, %186 : vector<1x256xi32>
      %188 = arith.andi %185, %187 : vector<1x256xi1>
      %189 = arith.extui %188 : vector<1x256xi1> to vector<1x256xi32>
      %190 = arith.sitofp %189 : vector<1x256xi32> to vector<1x256xf32>
      %cst_52 = arith.constant 0.000000e+00 : f32
      %191 = vector.broadcast %cst_52 : f32 to vector<4x256xf32>
      %cst_53 = arith.constant 0.000000e+00 : f32
      %192 = vector.broadcast %cst_53 : f32 to vector<4x256xf32>
      %c0_54 = arith.constant 0 : index
      %c80 = arith.constant 80 : index
      %193 = vector.load %arg5[%c0_54, %c80] : memref<4x512xf32, #tpu.memory_space<vmem>>, vector<4x256xf32>
      %194 = vector.extract_strided_slice %19 {offsets = [0, 3], sizes = [4, 1], strides = [1, 1]} : vector<4x128xf32> to vector<4x1xf32>
      %195 = vector.broadcast %194 : vector<4x1xf32> to vector<4x256xf32>
      %196 = arith.mulf %195, %193 : vector<4x256xf32>
      %197 = arith.addf %191, %196 : vector<4x256xf32>
      %c0_55 = arith.constant 0 : index
      %c96 = arith.constant 96 : index
      %198 = vector.load %arg5[%c0_55, %c96] : memref<4x512xf32, #tpu.memory_space<vmem>>, vector<4x256xf32>
      %199 = vector.extract_strided_slice %19 {offsets = [0, 10], sizes = [4, 1], strides = [1, 1]} : vector<4x128xf32> to vector<4x1xf32>
      %200 = vector.broadcast %199 : vector<4x1xf32> to vector<4x256xf32>
      %201 = arith.mulf %200, %198 : vector<4x256xf32>
      %202 = arith.addf %192, %201 : vector<4x256xf32>
      %c0_56 = arith.constant 0 : index
      %c112 = arith.constant 112 : index
      %203 = vector.load %arg5[%c0_56, %c112] : memref<4x512xf32, #tpu.memory_space<vmem>>, vector<4x256xf32>
      %204 = vector.extract_strided_slice %19 {offsets = [0, 17], sizes = [4, 1], strides = [1, 1]} : vector<4x128xf32> to vector<4x1xf32>
      %205 = vector.broadcast %204 : vector<4x1xf32> to vector<4x256xf32>
      %206 = arith.mulf %205, %203 : vector<4x256xf32>
      %207 = arith.addf %197, %206 : vector<4x256xf32>
      %c0_57 = arith.constant 0 : index
      %c128_58 = arith.constant 128 : index
      %208 = vector.load %arg5[%c0_57, %c128_58] : memref<4x512xf32, #tpu.memory_space<vmem>>, vector<4x256xf32>
      %209 = vector.extract_strided_slice %19 {offsets = [0, 24], sizes = [4, 1], strides = [1, 1]} : vector<4x128xf32> to vector<4x1xf32>
      %210 = vector.broadcast %209 : vector<4x1xf32> to vector<4x256xf32>
      %211 = arith.mulf %210, %208 : vector<4x256xf32>
      %212 = arith.addf %202, %211 : vector<4x256xf32>
      %c0_59 = arith.constant 0 : index
      %c144 = arith.constant 144 : index
      %213 = vector.load %arg5[%c0_59, %c144] : memref<4x512xf32, #tpu.memory_space<vmem>>, vector<4x256xf32>
      %214 = vector.extract_strided_slice %19 {offsets = [0, 31], sizes = [4, 1], strides = [1, 1]} : vector<4x128xf32> to vector<4x1xf32>
      %215 = vector.broadcast %214 : vector<4x1xf32> to vector<4x256xf32>
      %216 = arith.mulf %215, %213 : vector<4x256xf32>
      %217 = arith.addf %207, %216 : vector<4x256xf32>
      %c0_60 = arith.constant 0 : index
      %c160 = arith.constant 160 : index
      %218 = vector.load %arg5[%c0_60, %c160] : memref<4x512xf32, #tpu.memory_space<vmem>>, vector<4x256xf32>
      %219 = vector.extract_strided_slice %19 {offsets = [0, 38], sizes = [4, 1], strides = [1, 1]} : vector<4x128xf32> to vector<4x1xf32>
      %220 = vector.broadcast %219 : vector<4x1xf32> to vector<4x256xf32>
      %221 = arith.mulf %220, %218 : vector<4x256xf32>
      %222 = arith.addf %212, %221 : vector<4x256xf32>
      %c0_61 = arith.constant 0 : index
      %c176 = arith.constant 176 : index
      %223 = vector.load %arg5[%c0_61, %c176] : memref<4x512xf32, #tpu.memory_space<vmem>>, vector<4x256xf32>
      %224 = vector.extract_strided_slice %19 {offsets = [0, 45], sizes = [4, 1], strides = [1, 1]} : vector<4x128xf32> to vector<4x1xf32>
      %225 = vector.broadcast %224 : vector<4x1xf32> to vector<4x256xf32>
      %226 = arith.mulf %225, %223 : vector<4x256xf32>
      %227 = arith.addf %217, %226 : vector<4x256xf32>
      %228 = arith.addf %227, %222 : vector<4x256xf32>
      %229 = vector.broadcast %190 : vector<1x256xf32> to vector<4x256xf32>
      %230 = arith.mulf %229, %228 : vector<4x256xf32>
      %231 = arith.addf %183, %230 : vector<4x256xf32>
      %c-1_i32 = arith.constant -1 : i32
      %232 = vector.broadcast %c-1_i32 : i32 to vector<1x256xi32>
      %233 = arith.cmpi sge, %38, %232 : vector<1x256xi32>
      %c15_i32 = arith.constant 15 : i32
      %234 = vector.broadcast %c15_i32 : i32 to vector<1x256xi32>
      %235 = arith.cmpi slt, %38, %234 : vector<1x256xi32>
      %236 = arith.andi %233, %235 : vector<1x256xi1>
      %237 = arith.extui %236 : vector<1x256xi1> to vector<1x256xi32>
      %238 = arith.sitofp %237 : vector<1x256xi32> to vector<1x256xf32>
      %cst_62 = arith.constant 0.000000e+00 : f32
      %239 = vector.broadcast %cst_62 : f32 to vector<4x256xf32>
      %cst_63 = arith.constant 0.000000e+00 : f32
      %240 = vector.broadcast %cst_63 : f32 to vector<4x256xf32>
      %c0_64 = arith.constant 0 : index
      %c81 = arith.constant 81 : index
      %241 = vector.load %arg5[%c0_64, %c81] : memref<4x512xf32, #tpu.memory_space<vmem>>, vector<4x256xf32>
      %242 = vector.extract_strided_slice %19 {offsets = [0, 4], sizes = [4, 1], strides = [1, 1]} : vector<4x128xf32> to vector<4x1xf32>
      %243 = vector.broadcast %242 : vector<4x1xf32> to vector<4x256xf32>
      %244 = arith.mulf %243, %241 : vector<4x256xf32>
      %245 = arith.addf %239, %244 : vector<4x256xf32>
      %c0_65 = arith.constant 0 : index
      %c97 = arith.constant 97 : index
      %246 = vector.load %arg5[%c0_65, %c97] : memref<4x512xf32, #tpu.memory_space<vmem>>, vector<4x256xf32>
      %247 = vector.extract_strided_slice %19 {offsets = [0, 11], sizes = [4, 1], strides = [1, 1]} : vector<4x128xf32> to vector<4x1xf32>
      %248 = vector.broadcast %247 : vector<4x1xf32> to vector<4x256xf32>
      %249 = arith.mulf %248, %246 : vector<4x256xf32>
      %250 = arith.addf %240, %249 : vector<4x256xf32>
      %c0_66 = arith.constant 0 : index
      %c113 = arith.constant 113 : index
      %251 = vector.load %arg5[%c0_66, %c113] : memref<4x512xf32, #tpu.memory_space<vmem>>, vector<4x256xf32>
      %252 = vector.extract_strided_slice %19 {offsets = [0, 18], sizes = [4, 1], strides = [1, 1]} : vector<4x128xf32> to vector<4x1xf32>
      %253 = vector.broadcast %252 : vector<4x1xf32> to vector<4x256xf32>
      %254 = arith.mulf %253, %251 : vector<4x256xf32>
      %255 = arith.addf %245, %254 : vector<4x256xf32>
      %c0_67 = arith.constant 0 : index
      %c129 = arith.constant 129 : index
      %256 = vector.load %arg5[%c0_67, %c129] : memref<4x512xf32, #tpu.memory_space<vmem>>, vector<4x256xf32>
      %257 = vector.extract_strided_slice %19 {offsets = [0, 25], sizes = [4, 1], strides = [1, 1]} : vector<4x128xf32> to vector<4x1xf32>
      %258 = vector.broadcast %257 : vector<4x1xf32> to vector<4x256xf32>
      %259 = arith.mulf %258, %256 : vector<4x256xf32>
      %260 = arith.addf %250, %259 : vector<4x256xf32>
      %c0_68 = arith.constant 0 : index
      %c145 = arith.constant 145 : index
      %261 = vector.load %arg5[%c0_68, %c145] : memref<4x512xf32, #tpu.memory_space<vmem>>, vector<4x256xf32>
      %262 = vector.extract_strided_slice %19 {offsets = [0, 32], sizes = [4, 1], strides = [1, 1]} : vector<4x128xf32> to vector<4x1xf32>
      %263 = vector.broadcast %262 : vector<4x1xf32> to vector<4x256xf32>
      %264 = arith.mulf %263, %261 : vector<4x256xf32>
      %265 = arith.addf %255, %264 : vector<4x256xf32>
      %c0_69 = arith.constant 0 : index
      %c161 = arith.constant 161 : index
      %266 = vector.load %arg5[%c0_69, %c161] : memref<4x512xf32, #tpu.memory_space<vmem>>, vector<4x256xf32>
      %267 = vector.extract_strided_slice %19 {offsets = [0, 39], sizes = [4, 1], strides = [1, 1]} : vector<4x128xf32> to vector<4x1xf32>
      %268 = vector.broadcast %267 : vector<4x1xf32> to vector<4x256xf32>
      %269 = arith.mulf %268, %266 : vector<4x256xf32>
      %270 = arith.addf %260, %269 : vector<4x256xf32>
      %c0_70 = arith.constant 0 : index
      %c177 = arith.constant 177 : index
      %271 = vector.load %arg5[%c0_70, %c177] : memref<4x512xf32, #tpu.memory_space<vmem>>, vector<4x256xf32>
      %272 = vector.extract_strided_slice %19 {offsets = [0, 46], sizes = [4, 1], strides = [1, 1]} : vector<4x128xf32> to vector<4x1xf32>
      %273 = vector.broadcast %272 : vector<4x1xf32> to vector<4x256xf32>
      %274 = arith.mulf %273, %271 : vector<4x256xf32>
      %275 = arith.addf %265, %274 : vector<4x256xf32>
      %276 = arith.addf %275, %270 : vector<4x256xf32>
      %277 = vector.broadcast %238 : vector<1x256xf32> to vector<4x256xf32>
      %278 = arith.mulf %277, %276 : vector<4x256xf32>
      %279 = arith.addf %231, %278 : vector<4x256xf32>
      %c-2_i32 = arith.constant -2 : i32
      %280 = vector.broadcast %c-2_i32 : i32 to vector<1x256xi32>
      %281 = arith.cmpi sge, %38, %280 : vector<1x256xi32>
      %c14_i32 = arith.constant 14 : i32
      %282 = vector.broadcast %c14_i32 : i32 to vector<1x256xi32>
      %283 = arith.cmpi slt, %38, %282 : vector<1x256xi32>
      %284 = arith.andi %281, %283 : vector<1x256xi1>
      %285 = arith.extui %284 : vector<1x256xi1> to vector<1x256xi32>
      %286 = arith.sitofp %285 : vector<1x256xi32> to vector<1x256xf32>
      %cst_71 = arith.constant 0.000000e+00 : f32
      %287 = vector.broadcast %cst_71 : f32 to vector<4x256xf32>
      %cst_72 = arith.constant 0.000000e+00 : f32
      %288 = vector.broadcast %cst_72 : f32 to vector<4x256xf32>
      %c0_73 = arith.constant 0 : index
      %c82 = arith.constant 82 : index
      %289 = vector.load %arg5[%c0_73, %c82] : memref<4x512xf32, #tpu.memory_space<vmem>>, vector<4x256xf32>
      %290 = vector.extract_strided_slice %19 {offsets = [0, 5], sizes = [4, 1], strides = [1, 1]} : vector<4x128xf32> to vector<4x1xf32>
      %291 = vector.broadcast %290 : vector<4x1xf32> to vector<4x256xf32>
      %292 = arith.mulf %291, %289 : vector<4x256xf32>
      %293 = arith.addf %287, %292 : vector<4x256xf32>
      %c0_74 = arith.constant 0 : index
      %c98 = arith.constant 98 : index
      %294 = vector.load %arg5[%c0_74, %c98] : memref<4x512xf32, #tpu.memory_space<vmem>>, vector<4x256xf32>
      %295 = vector.extract_strided_slice %19 {offsets = [0, 12], sizes = [4, 1], strides = [1, 1]} : vector<4x128xf32> to vector<4x1xf32>
      %296 = vector.broadcast %295 : vector<4x1xf32> to vector<4x256xf32>
      %297 = arith.mulf %296, %294 : vector<4x256xf32>
      %298 = arith.addf %288, %297 : vector<4x256xf32>
      %c0_75 = arith.constant 0 : index
      %c114 = arith.constant 114 : index
      %299 = vector.load %arg5[%c0_75, %c114] : memref<4x512xf32, #tpu.memory_space<vmem>>, vector<4x256xf32>
      %300 = vector.extract_strided_slice %19 {offsets = [0, 19], sizes = [4, 1], strides = [1, 1]} : vector<4x128xf32> to vector<4x1xf32>
      %301 = vector.broadcast %300 : vector<4x1xf32> to vector<4x256xf32>
      %302 = arith.mulf %301, %299 : vector<4x256xf32>
      %303 = arith.addf %293, %302 : vector<4x256xf32>
      %c0_76 = arith.constant 0 : index
      %c130 = arith.constant 130 : index
      %304 = vector.load %arg5[%c0_76, %c130] : memref<4x512xf32, #tpu.memory_space<vmem>>, vector<4x256xf32>
      %305 = vector.extract_strided_slice %19 {offsets = [0, 26], sizes = [4, 1], strides = [1, 1]} : vector<4x128xf32> to vector<4x1xf32>
      %306 = vector.broadcast %305 : vector<4x1xf32> to vector<4x256xf32>
      %307 = arith.mulf %306, %304 : vector<4x256xf32>
      %308 = arith.addf %298, %307 : vector<4x256xf32>
      %c0_77 = arith.constant 0 : index
      %c146 = arith.constant 146 : index
      %309 = vector.load %arg5[%c0_77, %c146] : memref<4x512xf32, #tpu.memory_space<vmem>>, vector<4x256xf32>
      %310 = vector.extract_strided_slice %19 {offsets = [0, 33], sizes = [4, 1], strides = [1, 1]} : vector<4x128xf32> to vector<4x1xf32>
      %311 = vector.broadcast %310 : vector<4x1xf32> to vector<4x256xf32>
      %312 = arith.mulf %311, %309 : vector<4x256xf32>
      %313 = arith.addf %303, %312 : vector<4x256xf32>
      %c0_78 = arith.constant 0 : index
      %c162 = arith.constant 162 : index
      %314 = vector.load %arg5[%c0_78, %c162] : memref<4x512xf32, #tpu.memory_space<vmem>>, vector<4x256xf32>
      %315 = vector.extract_strided_slice %19 {offsets = [0, 40], sizes = [4, 1], strides = [1, 1]} : vector<4x128xf32> to vector<4x1xf32>
      %316 = vector.broadcast %315 : vector<4x1xf32> to vector<4x256xf32>
      %317 = arith.mulf %316, %314 : vector<4x256xf32>
      %318 = arith.addf %308, %317 : vector<4x256xf32>
      %c0_79 = arith.constant 0 : index
      %c178 = arith.constant 178 : index
      %319 = vector.load %arg5[%c0_79, %c178] : memref<4x512xf32, #tpu.memory_space<vmem>>, vector<4x256xf32>
      %320 = vector.extract_strided_slice %19 {offsets = [0, 47], sizes = [4, 1], strides = [1, 1]} : vector<4x128xf32> to vector<4x1xf32>
      %321 = vector.broadcast %320 : vector<4x1xf32> to vector<4x256xf32>
      %322 = arith.mulf %321, %319 : vector<4x256xf32>
      %323 = arith.addf %313, %322 : vector<4x256xf32>
      %324 = arith.addf %323, %318 : vector<4x256xf32>
      %325 = vector.broadcast %286 : vector<1x256xf32> to vector<4x256xf32>
      %326 = arith.mulf %325, %324 : vector<4x256xf32>
      %327 = arith.addf %279, %326 : vector<4x256xf32>
      %c-3_i32 = arith.constant -3 : i32
      %328 = vector.broadcast %c-3_i32 : i32 to vector<1x256xi32>
      %329 = arith.cmpi sge, %38, %328 : vector<1x256xi32>
      %c13_i32 = arith.constant 13 : i32
      %330 = vector.broadcast %c13_i32 : i32 to vector<1x256xi32>
      %331 = arith.cmpi slt, %38, %330 : vector<1x256xi32>
      %332 = arith.andi %329, %331 : vector<1x256xi1>
      %333 = arith.extui %332 : vector<1x256xi1> to vector<1x256xi32>
      %334 = arith.sitofp %333 : vector<1x256xi32> to vector<1x256xf32>
      %cst_80 = arith.constant 0.000000e+00 : f32
      %335 = vector.broadcast %cst_80 : f32 to vector<4x256xf32>
      %cst_81 = arith.constant 0.000000e+00 : f32
      %336 = vector.broadcast %cst_81 : f32 to vector<4x256xf32>
      %c0_82 = arith.constant 0 : index
      %c83 = arith.constant 83 : index
      %337 = vector.load %arg5[%c0_82, %c83] : memref<4x512xf32, #tpu.memory_space<vmem>>, vector<4x256xf32>
      %338 = vector.extract_strided_slice %19 {offsets = [0, 6], sizes = [4, 1], strides = [1, 1]} : vector<4x128xf32> to vector<4x1xf32>
      %339 = vector.broadcast %338 : vector<4x1xf32> to vector<4x256xf32>
      %340 = arith.mulf %339, %337 : vector<4x256xf32>
      %341 = arith.addf %335, %340 : vector<4x256xf32>
      %c0_83 = arith.constant 0 : index
      %c99 = arith.constant 99 : index
      %342 = vector.load %arg5[%c0_83, %c99] : memref<4x512xf32, #tpu.memory_space<vmem>>, vector<4x256xf32>
      %343 = vector.extract_strided_slice %19 {offsets = [0, 13], sizes = [4, 1], strides = [1, 1]} : vector<4x128xf32> to vector<4x1xf32>
      %344 = vector.broadcast %343 : vector<4x1xf32> to vector<4x256xf32>
      %345 = arith.mulf %344, %342 : vector<4x256xf32>
      %346 = arith.addf %336, %345 : vector<4x256xf32>
      %c0_84 = arith.constant 0 : index
      %c115 = arith.constant 115 : index
      %347 = vector.load %arg5[%c0_84, %c115] : memref<4x512xf32, #tpu.memory_space<vmem>>, vector<4x256xf32>
      %348 = vector.extract_strided_slice %19 {offsets = [0, 20], sizes = [4, 1], strides = [1, 1]} : vector<4x128xf32> to vector<4x1xf32>
      %349 = vector.broadcast %348 : vector<4x1xf32> to vector<4x256xf32>
      %350 = arith.mulf %349, %347 : vector<4x256xf32>
      %351 = arith.addf %341, %350 : vector<4x256xf32>
      %c0_85 = arith.constant 0 : index
      %c131 = arith.constant 131 : index
      %352 = vector.load %arg5[%c0_85, %c131] : memref<4x512xf32, #tpu.memory_space<vmem>>, vector<4x256xf32>
      %353 = vector.extract_strided_slice %19 {offsets = [0, 27], sizes = [4, 1], strides = [1, 1]} : vector<4x128xf32> to vector<4x1xf32>
      %354 = vector.broadcast %353 : vector<4x1xf32> to vector<4x256xf32>
      %355 = arith.mulf %354, %352 : vector<4x256xf32>
      %356 = arith.addf %346, %355 : vector<4x256xf32>
      %c0_86 = arith.constant 0 : index
      %c147 = arith.constant 147 : index
      %357 = vector.load %arg5[%c0_86, %c147] : memref<4x512xf32, #tpu.memory_space<vmem>>, vector<4x256xf32>
      %358 = vector.extract_strided_slice %19 {offsets = [0, 34], sizes = [4, 1], strides = [1, 1]} : vector<4x128xf32> to vector<4x1xf32>
      %359 = vector.broadcast %358 : vector<4x1xf32> to vector<4x256xf32>
      %360 = arith.mulf %359, %357 : vector<4x256xf32>
      %361 = arith.addf %351, %360 : vector<4x256xf32>
      %c0_87 = arith.constant 0 : index
      %c163 = arith.constant 163 : index
      %362 = vector.load %arg5[%c0_87, %c163] : memref<4x512xf32, #tpu.memory_space<vmem>>, vector<4x256xf32>
      %363 = vector.extract_strided_slice %19 {offsets = [0, 41], sizes = [4, 1], strides = [1, 1]} : vector<4x128xf32> to vector<4x1xf32>
      %364 = vector.broadcast %363 : vector<4x1xf32> to vector<4x256xf32>
      %365 = arith.mulf %364, %362 : vector<4x256xf32>
      %366 = arith.addf %356, %365 : vector<4x256xf32>
      %c0_88 = arith.constant 0 : index
      %c179 = arith.constant 179 : index
      %367 = vector.load %arg5[%c0_88, %c179] : memref<4x512xf32, #tpu.memory_space<vmem>>, vector<4x256xf32>
      %368 = vector.extract_strided_slice %19 {offsets = [0, 48], sizes = [4, 1], strides = [1, 1]} : vector<4x128xf32> to vector<4x1xf32>
      %369 = vector.broadcast %368 : vector<4x1xf32> to vector<4x256xf32>
      %370 = arith.mulf %369, %367 : vector<4x256xf32>
      %371 = arith.addf %361, %370 : vector<4x256xf32>
      %372 = arith.addf %371, %366 : vector<4x256xf32>
      %373 = vector.broadcast %334 : vector<1x256xf32> to vector<4x256xf32>
      %374 = arith.mulf %373, %372 : vector<4x256xf32>
      %375 = arith.addf %327, %374 : vector<4x256xf32>
      %376 = vector.extract_strided_slice %375 {offsets = [0, 0], sizes = [2, 256], strides = [1, 1]} : vector<4x256xf32> to vector<2x256xf32>
      %377 = vector.extract_strided_slice %375 {offsets = [2, 0], sizes = [2, 256], strides = [1, 1]} : vector<4x256xf32> to vector<2x256xf32>
      %378 = arith.addf %376, %377 : vector<2x256xf32>
      %379 = arith.negf %378 : vector<2x256xf32>
      %380 = math.exp %379 : vector<2x256xf32>
      %cst_89 = arith.constant 1.000000e+00 : f32
      %381 = vector.broadcast %cst_89 : f32 to vector<2x256xf32>
      %382 = arith.addf %381, %380 : vector<2x256xf32>
      %383 = arith.divf %381, %382 : vector<2x256xf32>
      %c0_90 = arith.constant 0 : index
      %c0_91 = arith.constant 0 : index
      %c0_92 = arith.constant 0 : index
      %384 = vector.load %arg4[%c0_90, %c0_91, %c0_92] : memref<2x1x256xf32, #tpu.memory_space<vmem>>, vector<2x1x256xf32>
      %385 = vector.shape_cast %384 : vector<2x1x256xf32> to vector<2x256xf32>
      %386 = vector.shape_cast %383 : vector<2x256xf32> to vector<2x1x256xf32>
      tpu.vector_store %arg4[%c0_90, %c0_91, %c0_92], %386 {strides = array<i32>} : memref<2x1x256xf32, #tpu.memory_space<vmem>>, vector<2x1x256xf32>,
    } else {
    }
    return
  }
  func.func @transform_0(%arg0: i32, %arg1: i32) -> (i32, i32) {
    %c0_i32 = arith.constant 0 : i32
    %c0_i32_0 = arith.constant 0 : i32
    %c0_i32_1 = arith.constant 0 : i32
    return %c0_i32, %c0_i32_0 : i32, i32
  }
  func.func @transform_1(%arg0: i32, %arg1: i32) -> (i32, i32, i32) {
    %c0_i32 = arith.constant 0 : i32
    %c0_i32_0 = arith.constant 0 : i32
    return %arg0, %arg1, %c0_i32 : i32, i32, i32
  }
  func.func @transform_2(%arg0: i32, %arg1: i32) -> (i32, i32, i32) {
    %c0_i32 = arith.constant 0 : i32
    %c0_i32_0 = arith.constant 0 : i32
    %c0_i32_1 = arith.constant 0 : i32
    return %arg0, %c0_i32, %c0_i32_0 : i32, i32, i32
  }
}

</mosaic_0001>

<llo_original>
// kernel: tpu_custom_call.1
$region0: #{tpu_custom_call.1}
  #allocation0 [shape = 'u32[]', space=smem, size = 0x4, offset = 0x4, fixed_abs, tag = 'smem constant byte address 0x4 - core index']
  #allocation1 [shape = 'u32[144,128]{1,0:T(1,128)}', space=vmem, size = 0x12000, scoped, tag = 'internal scratch']
  #allocation2 [shape = 'f32[4,512]{1,0:T(4,128)}', space=vmem, size = 0x2000, scoped, tag = 'scratch operand']
  %s0 = inlined_call_operand.hbm [shape: f32[4,128], index: 0, kind: input, shape index: {}]
  %s1 = inlined_call_operand.hbm [shape: f32[2,4,256], index: 1, kind: input, shape index: {}]
  %s2 = inlined_call_operand.hbm [shape: f32[2,1,256], index: 2, kind: output, shape index: {}]
  %s3 = sld [smem:[#allocation0]]
  $region34: #{tpu_custom_call.1} parent=0
    _
  %s5 = ssub.s32 1, %s3
  %s6 = scalar_select 0, %s5, %s3
  $region1: #{tpu_custom_call.1} parent=0
    #allocation3 [shape = 'u8[2048]{0}', space=vmem, size = 0x800, scoped, tag = 'input window, operand 0, single buffered']
    #allocation4 [shape = 's32[1]{0}', space=sflag, size = 0x4, scoped, tag = 'scoped memory for tpu_custom_call.1']
    #allocation5 [shape = 's32[1]{0}', space=sflag, size = 0x4, scoped, tag = 'scoped memory for tpu_custom_call.1']
    #allocation6 [shape = 'u8[8192]{0}', space=vmem, size = 0x2000, scoped, tag = 'input window, operand 1, single buffered']
    #allocation7 [shape = 's32[1]{0}', space=sflag, size = 0x4, scoped, tag = 'scoped memory for tpu_custom_call.1']
    #allocation8 [shape = 'u8[2048]{0}', space=vmem, size = 0x800, scoped, tag = 'output window, operand 0, single buffered']
    %7 = vsyncpa [#allocation4], 0
    %8 = vsyncpa [#allocation7], 0
    %9 = vsyncpa [#allocation5], 0
    // Predicated region
    $region2: #{tpu_custom_call.1} parent=1 // pred_check
      _
    $region3: #{tpu_custom_call.1} parent=1 // pred_check_branch
      %11 = sbr.rel (0) target = $region5
    $region4: #{tpu_custom_call.1} parent=1 // pred_region
      %s13 = ssub.s32 64, 64
      %14 = vsyncadd [#allocation4], %s13
      %s16 = sshll.u32 [#allocation3], 4
      %s17 = int_to_ptr.vmem [resolvable:$true] %s16
      %19 = dma.hbm_to_vmem [thread:$0]  %s0, 64, %s17, [#allocation4]
    $region5: #{tpu_custom_call.1} parent=1 // pred_fallthru
      _
    // Predicated region
    $region6: #{tpu_custom_call.1} parent=1 // pred_check
      _
    $region7: #{tpu_custom_call.1} parent=1 // pred_check_branch
      %21 = sbr.rel (0) target = $region9
    $region8: #{tpu_custom_call.1} parent=1 // pred_region
      %s23 = ssub.s32 256, 256
      %24 = vsyncadd [#allocation7], %s23
      %s25 = sshll.u32 [#allocation6], 4
      %s26 = int_to_ptr.vmem [resolvable:$true] %s25
      %31 = dma.hbm_to_vmem [thread:$0]  %s1, 256, %s26, [#allocation7], 128, 128, 8
    $region9: #{tpu_custom_call.1} parent=1 // pred_fallthru
      _
    // Predicated region
    $region10: #{tpu_custom_call.1} parent=1 // pred_check
      _
    $region11: #{tpu_custom_call.1} parent=1 // pred_check_branch
      %33 = sbr.rel (0) target = $region13
    $region12: #{tpu_custom_call.1} parent=1 // pred_region
      %34 = dma.done [#allocation4], 64
    $region13: #{tpu_custom_call.1} parent=1 // pred_fallthru
      _
    // Predicated region
    $region14: #{tpu_custom_call.1} parent=1 // pred_check
      _
    $region15: #{tpu_custom_call.1} parent=1 // pred_check_branch
      %36 = sbr.rel (0) target = $region17
    $region16: #{tpu_custom_call.1} parent=1 // pred_region
      %37 = dma.done [#allocation7], 256
    $region17: #{tpu_custom_call.1} parent=1 // pred_fallthru
      _
    %p38 = scmp.eq.s32.totalorder 0, 0
    // Predicated region
    $region18: #{tpu_custom_call.1} parent=1 // pred_check
      %p39 = pneg %p38
    $region19: #{tpu_custom_call.1} parent=1 // pred_check_branch
      %41 = sbr.rel (%p39) target = $region21
    $region20: #{tpu_custom_call.1} parent=1 // pred_region
      %42 = vst [vmem:[#allocation2] sm:$0xff] 0.0
      %43 = vst [vmem:[#allocation2 + $0x8] sm:$0xff] 0.0
      %44 = vst [vmem:[#allocation2 + $0x4] sm:$0xcc] -inf
    $region21: #{tpu_custom_call.1} parent=1 // pred_fallthru
      _
    %v45 = vld [vmem:[#allocation6] sm:$0xff]
    %v46 = vld [vmem:[#allocation6 + $0x8] sm:$0xff]
    %v49 = vcombine.high %v45, %v45
    %v50 = vcombine.high %v46, %v46
    %vm53 = vcmask 1043456
    %v54 = vsel %vm53, %v45, 0.0
    %v55 = vrot.slane %v54, 4
    %v56 = vadd.f32 %v54, %v55
    %v57 = vrot.slane %v56, 2
    %v58 = vadd.f32 %v56, %v57
    %v59 = vrot.slane %v58, 1
    %v60 = vadd.f32 %v58, %v59
    %v61 = vsel %vm53, %v49, 0.0
    %v62 = vrot.slane %v61, 4
    %v63 = vadd.f32 %v61, %v62
    %v64 = vrot.slane %v63, 2
    %v65 = vadd.f32 %v63, %v64
    %v66 = vrot.slane %v65, 1
    %v67 = vadd.f32 %v65, %v66
    %v68 = vsel %vm53, %v46, 0.0
    %v69 = vrot.slane %v68, 4
    %v70 = vadd.f32 %v68, %v69
    %v71 = vrot.slane %v70, 2
    %v72 = vadd.f32 %v70, %v71
    %v73 = vrot.slane %v72, 1
    %v74 = vadd.f32 %v72, %v73
    %v75 = vsel %vm53, %v50, 0.0
    %v76 = vrot.slane %v75, 4
    %v77 = vadd.f32 %v75, %v76
    %v78 = vrot.slane %v77, 2
    %v79 = vadd.f32 %v77, %v78
    %v80 = vrot.slane %v79, 1
    %v81 = vadd.f32 %v79, %v80
    %v82 = vadd.f32 %v60, 0.0
    %v83 = vadd.f32 %v67, 0.0
    %v84 = vadd.f32 %v74, 0.0
    %v85 = vadd.f32 %v81, 0.0
    %v86 = vsel %vm53, %v45, -inf
    %v87 = vrot.slane %v86, 4
    %v88 = vmax.f32 %v86, %v87
    %v89 = vrot.slane %v88, 2
    %v90 = vmax.f32 %v88, %v89
    %v91 = vrot.slane %v90, 1
    %v92 = vmax.f32 %v90, %v91
    %v93 = vsel %vm53, %v49, -inf
    %v94 = vrot.slane %v93, 4
    %v95 = vmax.f32 %v93, %v94
    %v96 = vrot.slane %v95, 2
    %v97 = vmax.f32 %v95, %v96
    %v98 = vrot.slane %v97, 1
    %v99 = vmax.f32 %v97, %v98
    %v100 = vsel %vm53, %v46, -inf
    %v101 = vrot.slane %v100, 4
    %v102 = vmax.f32 %v100, %v101
    %v103 = vrot.slane %v102, 2
    %v104 = vmax.f32 %v102, %v103
    %v105 = vrot.slane %v104, 1
    %v106 = vmax.f32 %v104, %v105
    %v107 = vsel %vm53, %v50, -inf
    %v108 = vrot.slane %v107, 4
    %v109 = vmax.f32 %v107, %v108
    %v110 = vrot.slane %v109, 2
    %v111 = vmax.f32 %v109, %v110
    %v112 = vrot.slane %v111, 1
    %v113 = vmax.f32 %v111, %v112
    %v114 = vld [vmem:[#allocation2 + $0x4] sm:$0x33]
    %v119 = vcombine.low %v82, %v83
    %v120 = vcombine.low %v84, %v85
    %v121 = vrot.slane %v120, 7
    %vm122 = vcmask 1041409
    %v123 = vsel %vm122, %v121, %v119
    %vm124 = vcmask 1045509
    %v125 = vsel %vm124, %v121, %v123
    %v127 = vadd.f32 %v114, %v125
    %128 = vst [vmem:[#allocation2 + $0x4] sm:$0x33] %v127
    %v129 = vld [vmem:[#allocation2 + $0x4] sm:$0xcc]
    %v134 = vcombine.low %v92, %v99
    %v135 = vcombine.low %v106, %v113
    %v136 = vrot.slane %v134, 6
    %v137 = vrot.slane %v135, 5
    %vm138 = vcmask 1043459
    %v139 = vsel %vm138, %v137, %v136
    %vm140 = vcmask 1047559
    %v141 = vsel %vm140, %v137, %v139
    %v143 = vmax.f32 %v129, %v141
    %144 = vst [vmem:[#allocation2 + $0x4] sm:$0xcc] %v143
    // Predicated region
    $region22: #{tpu_custom_call.1} parent=1 // pred_check
      %p145 = pneg %p38
    $region23: #{tpu_custom_call.1} parent=1 // pred_check_branch
      %147 = sbr.rel (%p145) target = $region25
    $region24: #{tpu_custom_call.1} parent=1 // pred_region
      %v148 = vld [vmem:[#allocation3] sm:$0xf]
      %v149 = vlaneseq
      %v150 = vand.u32 %v149, 127
      %v151 = vadd.s32 %v150, 128
      %vm152 = vcmp.lt.s32.totalorder %v150, 0
      %v153 = vsub.s32 0, %v150
      %v154 = vsel %vm152, %v153, %v150
      %v155 = vshrl.u32 %v154, 4
      %v156 = vand.u32 %v154, 15
      %v157 = vsub.s32 0, %v156
      %v158 = vsel %vm152, %v157, %v156
      %vm159 = vcmp.lt.s32.totalorder %v151, 0
      %v160 = vsub.s32 0, %v151
      %v161 = vsel %vm159, %v160, %v151
      %v162 = vshrl.u32 %v161, 4
      %v163 = vand.u32 %v161, 15
      %v164 = vsub.s32 0, %v163
      %v165 = vsel %vm159, %v164, %v163
      %vm166 = vcmp.ne.s32.totalorder %v158, 0
      %vm167 = vcmp.ne.s32.totalorder %v165, 0
      %vm168 = vcmp.lt.s32.totalorder %v158, 0
      %vm169 = vcmp.lt.s32.totalorder %v165, 0
      %vm170 = vmand %vm168, %vm166
      %vm171 = vmand %vm169, %vm167
      %v172 = vadd.s32 %v158, 16
      %v173 = vadd.s32 %v165, 16
      %v174 = vsel %vm170, %v172, %v158
      %v175 = vsel %vm171, %v173, %v165
      %vm176 = vcmp.ge.s32.totalorder %v174, 3
      %vm177 = vcmp.ge.s32.totalorder %v175, 3
      %vm178 = vcmp.lt.s32.totalorder %v174, 19
      %vm179 = vcmp.lt.s32.totalorder %v175, 19
      %vm180 = vmand %vm176, %vm178
      %vm181 = vmand %vm177, %vm179
      %v182 = vsel %vm180, 1, 0
      %v183 = vsel %vm181, 1, 0
      %v184 = vcvt.s32.f32 %v182
      %v185 = vcvt.s32.f32 %v183
      %v186 = vld [vmem:[#allocation2] sm:$0xff]
      %v187 = vld [vmem:[#allocation2 + $0x8] sm:$0xf]
      %189 = vset.pattern.permute.xlu0 0
      %190 = vperm.xlu0 %189, %v148
      %v191 = vpop.permute.xlu0 %190
      %v195 = vcombine.high %v186, %v186
      %196 = vrot.lane.b32.xlu0 %v186, 51
      %v197 = vpop.permute.xlu0 %196
      %198 = vrot.lane.b32.xlu0 %v195, 51
      %v199 = vpop.permute.xlu0 %198
      %200 = vrot.lane.b32.xlu0 %v187, 51
      %v201 = vpop.permute.xlu0 %200
      %vm202 = vcmask 416768
      %v203 = vsel %vm202, %v197, %v199
      %v204 = vsel %vm202, %v199, %v201
      %v207 = vmul.f32 %v191, %v203
      %v208 = vmul.f32 %v191, %v204
      %v209 = vadd.f32 %v207, 0.0
      %v210 = vadd.f32 %v208, 0.0
      %v211 = vld [vmem:[#allocation2] sm:$0xff]
      %v212 = vld [vmem:[#allocation2 + $0x8] sm:$0xf]
      %213 = vset.pattern.permute.xlu0 7
      %214 = vperm.xlu0 %213, %v148
      %v215 = vpop.permute.xlu0 %214
      %v219 = vcombine.high %v211, %v211
      %220 = vrot.lane.b32.xlu0 %v211, 35
      %v221 = vpop.permute.xlu0 %220
      %222 = vrot.lane.b32.xlu0 %v219, 35
      %v223 = vpop.permute.xlu0 %222
      %224 = vrot.lane.b32.xlu0 %v212, 35
      %v225 = vpop.permute.xlu0 %224
      %vm226 = vcmask 285696
      %v227 = vsel %vm226, %v221, %v223
      %v228 = vsel %vm226, %v223, %v225
      %v231 = vmul.f32 %v215, %v227
      %v232 = vmul.f32 %v215, %v228
      %v233 = vadd.f32 %v231, 0.0
      %v234 = vadd.f32 %v232, 0.0
      %v235 = vld [vmem:[#allocation2] sm:$0xff]
      %v236 = vld [vmem:[#allocation2 + $0x8] sm:$0xf]
      %237 = vset.pattern.permute.xlu0 14
      %238 = vperm.xlu0 %237, %v148
      %v239 = vpop.permute.xlu0 %238
      %v243 = vcombine.high %v235, %v235
      %244 = vrot.lane.b32.xlu0 %v235, 19
      %v245 = vpop.permute.xlu0 %244
      %246 = vrot.lane.b32.xlu0 %v243, 19
      %v247 = vpop.permute.xlu0 %246
      %248 = vrot.lane.b32.xlu0 %v236, 19
      %v249 = vpop.permute.xlu0 %248
      %vm250 = vcmask 154624
      %v251 = vsel %vm250, %v245, %v247
      %v252 = vsel %vm250, %v247, %v249
      %v255 = vmul.f32 %v239, %v251
      %v256 = vmul.f32 %v239, %v252
      %v257 = vadd.f32 %v209, %v255
      %v258 = vadd.f32 %v210, %v256
      %v259 = vld [vmem:[#allocation2] sm:$0xff]
      %v260 = vld [vmem:[#allocation2 + $0x8] sm:$0xf]
      %261 = vset.pattern.permute.xlu0 21
      %262 = vperm.xlu0 %261, %v148
      %v263 = vpop.permute.xlu0 %262
      %v267 = vcombine.high %v259, %v259
      %268 = vrot.lane.b32.xlu0 %v259, 3
      %v269 = vpop.permute.xlu0 %268
      %270 = vrot.lane.b32.xlu0 %v267, 3
      %v271 = vpop.permute.xlu0 %270
      %272 = vrot.lane.b32.xlu0 %v260, 3
      %v273 = vpop.permute.xlu0 %272
      %vm274 = vcmask 23552
      %v275 = vsel %vm274, %v269, %v271
      %v276 = vsel %vm274, %v271, %v273
      %v279 = vmul.f32 %v263, %v275
      %v280 = vmul.f32 %v263, %v276
      %v281 = vadd.f32 %v233, %v279
      %v282 = vadd.f32 %v234, %v280
      %v283 = vld [vmem:[#allocation2 + $0x4] sm:$0xff]
      %v284 = vld [vmem:[#allocation2 + $0xc] sm:$0xf]
      %285 = vset.pattern.permute.xlu0 28
      %286 = vperm.xlu0 %285, %v148
      %v287 = vpop.permute.xlu0 %286
      %v291 = vcombine.high %v283, %v283
      %292 = vrot.lane.b32.xlu0 %v283, 115
      %v293 = vpop.permute.xlu0 %292
      %294 = vrot.lane.b32.xlu0 %v291, 115
      %v295 = vpop.permute.xlu0 %294
      %296 = vrot.lane.b32.xlu0 %v284, 115
      %v297 = vpop.permute.xlu0 %296
      %vm298 = vcmask 941056
      %v299 = vsel %vm298, %v293, %v295
      %v300 = vsel %vm298, %v295, %v297
      %v303 = vmul.f32 %v287, %v299
      %v304 = vmul.f32 %v287, %v300
      %v305 = vadd.f32 %v257, %v303
      %v306 = vadd.f32 %v258, %v304
      %v307 = vld [vmem:[#allocation2 + $0x4] sm:$0xff]
      %v308 = vld [vmem:[#allocation2 + $0xc] sm:$0xf]
      %309 = vset.pattern.permute.xlu0 35
      %310 = vperm.xlu0 %309, %v148
      %v311 = vpop.permute.xlu0 %310
      %v315 = vcombine.high %v307, %v307
      %316 = vrot.lane.b32.xlu0 %v307, 99
      %v317 = vpop.permute.xlu0 %316
      %318 = vrot.lane.b32.xlu0 %v315, 99
      %v319 = vpop.permute.xlu0 %318
      %320 = vrot.lane.b32.xlu0 %v308, 99
      %v321 = vpop.permute.xlu0 %320
      %vm322 = vcmask 809984
      %v323 = vsel %vm322, %v317, %v319
      %v324 = vsel %vm322, %v319, %v321
      %v327 = vmul.f32 %v311, %v323
      %v328 = vmul.f32 %v311, %v324
      %v329 = vadd.f32 %v281, %v327
      %v330 = vadd.f32 %v282, %v328
      %v331 = vld [vmem:[#allocation2 + $0x4] sm:$0xff]
      %v332 = vld [vmem:[#allocation2 + $0xc] sm:$0xf]
      %333 = vset.pattern.permute.xlu0 42
      %334 = vperm.xlu0 %333, %v148
      %v335 = vpop.permute.xlu0 %334
      %v339 = vcombine.high %v331, %v331
      %340 = vrot.lane.b32.xlu0 %v331, 83
      %v341 = vpop.permute.xlu0 %340
      %342 = vrot.lane.b32.xlu0 %v339, 83
      %v343 = vpop.permute.xlu0 %342
      %344 = vrot.lane.b32.xlu0 %v332, 83
      %v345 = vpop.permute.xlu0 %344
      %vm346 = vcmask 678912
      %v347 = vsel %vm346, %v341, %v343
      %v348 = vsel %vm346, %v343, %v345
      %v351 = vmul.f32 %v335, %v347
      %v352 = vmul.f32 %v335, %v348
      %v353 = vadd.f32 %v305, %v351
      %v354 = vadd.f32 %v306, %v352
      %v355 = vadd.f32 %v353, %v329
      %v356 = vadd.f32 %v354, %v330
      %v357 = vmul.f32 %v184, %v355
      %v358 = vmul.f32 %v185, %v356
      %v359 = vadd.f32 %v357, 0.0
      %v360 = vadd.f32 %v358, 0.0
      %vm361 = vcmp.ge.s32.totalorder %v174, 2
      %vm362 = vcmp.ge.s32.totalorder %v175, 2
      %vm363 = vcmp.lt.s32.totalorder %v174, 18
      %vm364 = vcmp.lt.s32.totalorder %v175, 18
      %vm365 = vmand %vm361, %vm363
      %vm366 = vmand %vm362, %vm364
      %v367 = vsel %vm365, 1, 0
      %v368 = vsel %vm366, 1, 0
      %v369 = vcvt.s32.f32 %v367
      %v370 = vcvt.s32.f32 %v368
      %v371 = vld [vmem:[#allocation2] sm:$0xff]
      %v372 = vld [vmem:[#allocation2 + $0x8] sm:$0xf]
      %373 = vset.pattern.permute.xlu0 1
      %374 = vperm.xlu0 %373, %v148
      %v375 = vpop.permute.xlu0 %374
      %v379 = vcombine.high %v371, %v371
      %380 = vrot.lane.b32.xlu0 %v371, 50
      %v381 = vpop.permute.xlu0 %380
      %382 = vrot.lane.b32.xlu0 %v379, 50
      %v383 = vpop.permute.xlu0 %382
      %384 = vrot.lane.b32.xlu0 %v372, 50
      %v385 = vpop.permute.xlu0 %384
      %vm386 = vcmask 408576
      %v387 = vsel %vm386, %v381, %v383
      %v388 = vsel %vm386, %v383, %v385
      %v391 = vmul.f32 %v375, %v387
      %v392 = vmul.f32 %v375, %v388
      %v393 = vadd.f32 %v391, 0.0
      %v394 = vadd.f32 %v392, 0.0
      %v395 = vld [vmem:[#allocation2] sm:$0xff]
      %v396 = vld [vmem:[#allocation2 + $0x8] sm:$0xf]
      %397 = vset.pattern.permute.xlu0 8
      %398 = vperm.xlu0 %397, %v148
      %v399 = vpop.permute.xlu0 %398
      %v403 = vcombine.high %v395, %v395
      %404 = vrot.lane.b32.xlu0 %v395, 34
      %v405 = vpop.permute.xlu0 %404
      %406 = vrot.lane.b32.xlu0 %v403, 34
      %v407 = vpop.permute.xlu0 %406
      %408 = vrot.lane.b32.xlu0 %v396, 34
      %v409 = vpop.permute.xlu0 %408
      %vm410 = vcmask 277504
      %v411 = vsel %vm410, %v405, %v407
      %v412 = vsel %vm410, %v407, %v409
      %v415 = vmul.f32 %v399, %v411
      %v416 = vmul.f32 %v399, %v412
      %v417 = vadd.f32 %v415, 0.0
      %v418 = vadd.f32 %v416, 0.0
      %v419 = vld [vmem:[#allocation2] sm:$0xff]
      %v420 = vld [vmem:[#allocation2 + $0x8] sm:$0xf]
      %421 = vset.pattern.permute.xlu0 15
      %422 = vperm.xlu0 %421, %v148
      %v423 = vpop.permute.xlu0 %422
      %v427 = vcombine.high %v419, %v419
      %428 = vrot.lane.b32.xlu0 %v419, 18
      %v429 = vpop.permute.xlu0 %428
      %430 = vrot.lane.b32.xlu0 %v427, 18
      %v431 = vpop.permute.xlu0 %430
      %432 = vrot.lane.b32.xlu0 %v420, 18
      %v433 = vpop.permute.xlu0 %432
      %vm434 = vcmask 146432
      %v435 = vsel %vm434, %v429, %v431
      %v436 = vsel %vm434, %v431, %v433
      %v439 = vmul.f32 %v423, %v435
      %v440 = vmul.f32 %v423, %v436
      %v441 = vadd.f32 %v393, %v439
      %v442 = vadd.f32 %v394, %v440
      %v443 = vld [vmem:[#allocation2] sm:$0xff]
      %v444 = vld [vmem:[#allocation2 + $0x8] sm:$0xf]
      %445 = vset.pattern.permute.xlu0 22
      %446 = vperm.xlu0 %445, %v148
      %v447 = vpop.permute.xlu0 %446
      %v451 = vcombine.high %v443, %v443
      %452 = vrot.lane.b32.xlu0 %v443, 2
      %v453 = vpop.permute.xlu0 %452
      %454 = vrot.lane.b32.xlu0 %v451, 2
      %v455 = vpop.permute.xlu0 %454
      %456 = vrot.lane.b32.xlu0 %v444, 2
      %v457 = vpop.permute.xlu0 %456
      %vm458 = vcmask 15360
      %v459 = vsel %vm458, %v453, %v455
      %v460 = vsel %vm458, %v455, %v457
      %v463 = vmul.f32 %v447, %v459
      %v464 = vmul.f32 %v447, %v460
      %v465 = vadd.f32 %v417, %v463
      %v466 = vadd.f32 %v418, %v464
      %v467 = vld [vmem:[#allocation2 + $0x4] sm:$0xff]
      %v468 = vld [vmem:[#allocation2 + $0xc] sm:$0xf]
      %469 = vset.pattern.permute.xlu0 29
      %470 = vperm.xlu0 %469, %v148
      %v471 = vpop.permute.xlu0 %470
      %v475 = vcombine.high %v467, %v467
      %476 = vrot.lane.b32.xlu0 %v467, 114
      %v477 = vpop.permute.xlu0 %476
      %478 = vrot.lane.b32.xlu0 %v475, 114
      %v479 = vpop.permute.xlu0 %478
      %480 = vrot.lane.b32.xlu0 %v468, 114
      %v481 = vpop.permute.xlu0 %480
      %vm482 = vcmask 932864
      %v483 = vsel %vm482, %v477, %v479
      %v484 = vsel %vm482, %v479, %v481
      %v487 = vmul.f32 %v471, %v483
      %v488 = vmul.f32 %v471, %v484
      %v489 = vadd.f32 %v441, %v487
      %v490 = vadd.f32 %v442, %v488
      %v491 = vld [vmem:[#allocation2 + $0x4] sm:$0xff]
      %v492 = vld [vmem:[#allocation2 + $0xc] sm:$0xf]
      %493 = vset.pattern.permute.xlu0 36
      %494 = vperm.xlu0 %493, %v148
      %v495 = vpop.permute.xlu0 %494
      %v499 = vcombine.high %v491, %v491
      %500 = vrot.lane.b32.xlu0 %v491, 98
      %v501 = vpop.permute.xlu0 %500
      %502 = vrot.lane.b32.xlu0 %v499, 98
      %v503 = vpop.permute.xlu0 %502
      %504 = vrot.lane.b32.xlu0 %v492, 98
      %v505 = vpop.permute.xlu0 %504
      %vm506 = vcmask 801792
      %v507 = vsel %vm506, %v501, %v503
      %v508 = vsel %vm506, %v503, %v505
      %v511 = vmul.f32 %v495, %v507
      %v512 = vmul.f32 %v495, %v508
      %v513 = vadd.f32 %v465, %v511
      %v514 = vadd.f32 %v466, %v512
      %v515 = vld [vmem:[#allocation2 + $0x4] sm:$0xff]
      %v516 = vld [vmem:[#allocation2 + $0xc] sm:$0xf]
      %517 = vset.pattern.permute.xlu0 43
      %518 = vperm.xlu0 %517, %v148
      %v519 = vpop.permute.xlu0 %518
      %v523 = vcombine.high %v515, %v515
      %524 = vrot.lane.b32.xlu0 %v515, 82
      %v525 = vpop.permute.xlu0 %524
      %526 = vrot.lane.b32.xlu0 %v523, 82
      %v527 = vpop.permute.xlu0 %526
      %528 = vrot.lane.b32.xlu0 %v516, 82
      %v529 = vpop.permute.xlu0 %528
      %vm530 = vcmask 670720
      %v531 = vsel %vm530, %v525, %v527
      %v532 = vsel %vm530, %v527, %v529
      %v535 = vmul.f32 %v519, %v531
      %v536 = vmul.f32 %v519, %v532
      %v537 = vadd.f32 %v489, %v535
      %v538 = vadd.f32 %v490, %v536
      %v539 = vadd.f32 %v537, %v513
      %v540 = vadd.f32 %v538, %v514
      %v541 = vmul.f32 %v369, %v539
      %v542 = vmul.f32 %v370, %v540
      %v543 = vadd.f32 %v359, %v541
      %v544 = vadd.f32 %v360, %v542
      %vm545 = vcmp.ge.s32.totalorder %v174, 1
      %vm546 = vcmp.ge.s32.totalorder %v175, 1
      %vm547 = vcmp.lt.s32.totalorder %v174, 17
      %vm548 = vcmp.lt.s32.totalorder %v175, 17
      %vm549 = vmand %vm545, %vm547
      %vm550 = vmand %vm546, %vm548
      %v551 = vsel %vm549, 1, 0
      %v552 = vsel %vm550, 1, 0
      %v553 = vcvt.s32.f32 %v551
      %v554 = vcvt.s32.f32 %v552
      %v555 = vld [vmem:[#allocation2] sm:$0xff]
      %v556 = vld [vmem:[#allocation2 + $0x8] sm:$0xf]
      %557 = vset.pattern.permute.xlu0 2
      %558 = vperm.xlu0 %557, %v148
      %v559 = vpop.permute.xlu0 %558
      %v563 = vcombine.high %v555, %v555
      %564 = vrot.lane.b32.xlu0 %v555, 49
      %v565 = vpop.permute.xlu0 %564
      %566 = vrot.lane.b32.xlu0 %v563, 49
      %v567 = vpop.permute.xlu0 %566
      %568 = vrot.lane.b32.xlu0 %v556, 49
      %v569 = vpop.permute.xlu0 %568
      %vm570 = vcmask 400384
      %v571 = vsel %vm570, %v565, %v567
      %v572 = vsel %vm570, %v567, %v569
      %v575 = vmul.f32 %v559, %v571
      %v576 = vmul.f32 %v559, %v572
      %v577 = vadd.f32 %v575, 0.0
      %v578 = vadd.f32 %v576, 0.0
      %v579 = vld [vmem:[#allocation2] sm:$0xff]
      %v580 = vld [vmem:[#allocation2 + $0x8] sm:$0xf]
      %581 = vset.pattern.permute.xlu0 9
      %582 = vperm.xlu0 %581, %v148
      %v583 = vpop.permute.xlu0 %582
      %v587 = vcombine.high %v579, %v579
      %588 = vrot.lane.b32.xlu0 %v579, 33
      %v589 = vpop.permute.xlu0 %588
      %590 = vrot.lane.b32.xlu0 %v587, 33
      %v591 = vpop.permute.xlu0 %590
      %592 = vrot.lane.b32.xlu0 %v580, 33
      %v593 = vpop.permute.xlu0 %592
      %vm594 = vcmask 269312
      %v595 = vsel %vm594, %v589, %v591
      %v596 = vsel %vm594, %v591, %v593
      %v599 = vmul.f32 %v583, %v595
      %v600 = vmul.f32 %v583, %v596
      %v601 = vadd.f32 %v599, 0.0
      %v602 = vadd.f32 %v600, 0.0
      %v603 = vld [vmem:[#allocation2] sm:$0xff]
      %v604 = vld [vmem:[#allocation2 + $0x8] sm:$0xf]
      %605 = vset.pattern.permute.xlu0 16
      %606 = vperm.xlu0 %605, %v148
      %v607 = vpop.permute.xlu0 %606
      %v611 = vcombine.high %v603, %v603
      %612 = vrot.lane.b32.xlu0 %v603, 17
      %v613 = vpop.permute.xlu0 %612
      %614 = vrot.lane.b32.xlu0 %v611, 17
      %v615 = vpop.permute.xlu0 %614
      %616 = vrot.lane.b32.xlu0 %v604, 17
      %v617 = vpop.permute.xlu0 %616
      %vm618 = vcmask 138240
      %v619 = vsel %vm618, %v613, %v615
      %v620 = vsel %vm618, %v615, %v617
      %v623 = vmul.f32 %v607, %v619
      %v624 = vmul.f32 %v607, %v620
      %v625 = vadd.f32 %v577, %v623
      %v626 = vadd.f32 %v578, %v624
      %v627 = vld [vmem:[#allocation2] sm:$0xff]
      %v628 = vld [vmem:[#allocation2 + $0x8] sm:$0xf]
      %629 = vset.pattern.permute.xlu0 23
      %630 = vperm.xlu0 %629, %v148
      %v631 = vpop.permute.xlu0 %630
      %v635 = vcombine.high %v627, %v627
      %636 = vrot.lane.b32.xlu0 %v627, 1
      %v637 = vpop.permute.xlu0 %636
      %638 = vrot.lane.b32.xlu0 %v635, 1
      %v639 = vpop.permute.xlu0 %638
      %640 = vrot.lane.b32.xlu0 %v628, 1
      %v641 = vpop.permute.xlu0 %640
      %vm642 = vcmask 7168
      %v643 = vsel %vm642, %v637, %v639
      %v644 = vsel %vm642, %v639, %v641
      %v647 = vmul.f32 %v631, %v643
      %v648 = vmul.f32 %v631, %v644
      %v649 = vadd.f32 %v601, %v647
      %v650 = vadd.f32 %v602, %v648
      %v651 = vld [vmem:[#allocation2 + $0x4] sm:$0xff]
      %v652 = vld [vmem:[#allocation2 + $0xc] sm:$0xf]
      %653 = vset.pattern.permute.xlu0 30
      %654 = vperm.xlu0 %653, %v148
      %v655 = vpop.permute.xlu0 %654
      %v659 = vcombine.high %v651, %v651
      %660 = vrot.lane.b32.xlu0 %v651, 113
      %v661 = vpop.permute.xlu0 %660
      %662 = vrot.lane.b32.xlu0 %v659, 113
      %v663 = vpop.permute.xlu0 %662
      %664 = vrot.lane.b32.xlu0 %v652, 113
      %v665 = vpop.permute.xlu0 %664
      %vm666 = vcmask 924672
      %v667 = vsel %vm666, %v661, %v663
      %v668 = vsel %vm666, %v663, %v665
      %v671 = vmul.f32 %v655, %v667
      %v672 = vmul.f32 %v655, %v668
      %v673 = vadd.f32 %v625, %v671
      %v674 = vadd.f32 %v626, %v672
      %v675 = vld [vmem:[#allocation2 + $0x4] sm:$0xff]
      %v676 = vld [vmem:[#allocation2 + $0xc] sm:$0xf]
      %677 = vset.pattern.permute.xlu0 37
      %678 = vperm.xlu0 %677, %v148
      %v679 = vpop.permute.xlu0 %678
      %v683 = vcombine.high %v675, %v675
      %684 = vrot.lane.b32.xlu0 %v675, 97
      %v685 = vpop.permute.xlu0 %684
      %686 = vrot.lane.b32.xlu0 %v683, 97
      %v687 = vpop.permute.xlu0 %686
      %688 = vrot.lane.b32.xlu0 %v676, 97
      %v689 = vpop.permute.xlu0 %688
      %vm690 = vcmask 793600
      %v691 = vsel %vm690, %v685, %v687
      %v692 = vsel %vm690, %v687, %v689
      %v695 = vmul.f32 %v679, %v691
      %v696 = vmul.f32 %v679, %v692
      %v697 = vadd.f32 %v649, %v695
      %v698 = vadd.f32 %v650, %v696
      %v699 = vld [vmem:[#allocation2 + $0x4] sm:$0xff]
      %v700 = vld [vmem:[#allocation2 + $0xc] sm:$0xf]
      %701 = vset.pattern.permute.xlu0 44
      %702 = vperm.xlu0 %701, %v148
      %v703 = vpop.permute.xlu0 %702
      %v707 = vcombine.high %v699, %v699
      %708 = vrot.lane.b32.xlu0 %v699, 81
      %v709 = vpop.permute.xlu0 %708
      %710 = vrot.lane.b32.xlu0 %v707, 81
      %v711 = vpop.permute.xlu0 %710
      %712 = vrot.lane.b32.xlu0 %v700, 81
      %v713 = vpop.permute.xlu0 %712
      %vm714 = vcmask 662528
      %v715 = vsel %vm714, %v709, %v711
      %v716 = vsel %vm714, %v711, %v713
      %v719 = vmul.f32 %v703, %v715
      %v720 = vmul.f32 %v703, %v716
      %v721 = vadd.f32 %v673, %v719
      %v722 = vadd.f32 %v674, %v720
      %v723 = vadd.f32 %v721, %v697
      %v724 = vadd.f32 %v722, %v698
      %v725 = vmul.f32 %v553, %v723
      %v726 = vmul.f32 %v554, %v724
      %v727 = vadd.f32 %v543, %v725
      %v728 = vadd.f32 %v544, %v726
      %vm729 = vcmp.ge.s32.totalorder %v174, 0
      %vm730 = vcmp.ge.s32.totalorder %v175, 0
      %vm731 = vcmp.lt.s32.totalorder %v174, 16
      %vm732 = vcmp.lt.s32.totalorder %v175, 16
      %vm733 = vmand %vm729, %vm731
      %vm734 = vmand %vm730, %vm732
      %v735 = vsel %vm733, 1, 0
      %v736 = vsel %vm734, 1, 0
      %v737 = vcvt.s32.f32 %v735
      %v738 = vcvt.s32.f32 %v736
      %v739 = vld [vmem:[#allocation2] sm:$0xff]
      %v740 = vld [vmem:[#allocation2 + $0x8] sm:$0xf]
      %741 = vset.pattern.permute.xlu0 3
      %742 = vperm.xlu0 %741, %v148
      %v743 = vpop.permute.xlu0 %742
      %v747 = vcombine.high %v739, %v739
      %748 = vrot.lane.b32.xlu0 %v739, 48
      %v749 = vpop.permute.xlu0 %748
      %750 = vrot.lane.b32.xlu0 %v747, 48
      %v751 = vpop.permute.xlu0 %750
      %752 = vrot.lane.b32.xlu0 %v740, 48
      %v753 = vpop.permute.xlu0 %752
      %vm754 = vcmask 392192
      %v755 = vsel %vm754, %v749, %v751
      %v756 = vsel %vm754, %v751, %v753
      %v759 = vmul.f32 %v743, %v755
      %v760 = vmul.f32 %v743, %v756
      %v761 = vadd.f32 %v759, 0.0
      %v762 = vadd.f32 %v760, 0.0
      %v763 = vld [vmem:[#allocation2] sm:$0xff]
      %v764 = vld [vmem:[#allocation2 + $0x8] sm:$0xf]
      %765 = vset.pattern.permute.xlu0 10
      %766 = vperm.xlu0 %765, %v148
      %v767 = vpop.permute.xlu0 %766
      %v771 = vcombine.high %v763, %v763
      %772 = vrot.lane.b32.xlu0 %v763, 32
      %v773 = vpop.permute.xlu0 %772
      %774 = vrot.lane.b32.xlu0 %v771, 32
      %v775 = vpop.permute.xlu0 %774
      %776 = vrot.lane.b32.xlu0 %v764, 32
      %v777 = vpop.permute.xlu0 %776
      %vm778 = vcmask 261120
      %v779 = vsel %vm778, %v773, %v775
      %v780 = vsel %vm778, %v775, %v777
      %v783 = vmul.f32 %v767, %v779
      %v784 = vmul.f32 %v767, %v780
      %v785 = vadd.f32 %v783, 0.0
      %v786 = vadd.f32 %v784, 0.0
      %v787 = vld [vmem:[#allocation2] sm:$0xff]
      %v788 = vld [vmem:[#allocation2 + $0x8] sm:$0xf]
      %789 = vset.pattern.permute.xlu0 17
      %790 = vperm.xlu0 %789, %v148
      %v791 = vpop.permute.xlu0 %790
      %v795 = vcombine.high %v787, %v787
      %796 = vrot.lane.b32.xlu0 %v787, 16
      %v797 = vpop.permute.xlu0 %796
      %798 = vrot.lane.b32.xlu0 %v795, 16
      %v799 = vpop.permute.xlu0 %798
      %800 = vrot.lane.b32.xlu0 %v788, 16
      %v801 = vpop.permute.xlu0 %800
      %vm802 = vcmask 130048
      %v803 = vsel %vm802, %v797, %v799
      %v804 = vsel %vm802, %v799, %v801
      %v807 = vmul.f32 %v791, %v803
      %v808 = vmul.f32 %v791, %v804
      %v809 = vadd.f32 %v761, %v807
      %v810 = vadd.f32 %v762, %v808
      %v811 = vld [vmem:[#allocation2 + $0x4] sm:$0xff]
      %812 = vset.pattern.permute.xlu0 24
      %813 = vperm.xlu0 %812, %v148
      %v814 = vpop.permute.xlu0 %813
      %v817 = vcombine.high %v811, %v811
      %v819 = vmul.f32 %v814, %v811
      %v820 = vmul.f32 %v814, %v817
      %v821 = vadd.f32 %v785, %v819
      %v822 = vadd.f32 %v786, %v820
      %v823 = vld [vmem:[#allocation2 + $0x4] sm:$0xff]
      %v824 = vld [vmem:[#allocation2 + $0xc] sm:$0xf]
      %825 = vset.pattern.permute.xlu0 31
      %826 = vperm.xlu0 %825, %v148
      %v827 = vpop.permute.xlu0 %826
      %v831 = vcombine.high %v823, %v823
      %832 = vrot.lane.b32.xlu0 %v823, 112
      %v833 = vpop.permute.xlu0 %832
      %834 = vrot.lane.b32.xlu0 %v831, 112
      %v835 = vpop.permute.xlu0 %834
      %836 = vrot.lane.b32.xlu0 %v824, 112
      %v837 = vpop.permute.xlu0 %836
      %vm838 = vcmask 916480
      %v839 = vsel %vm838, %v833, %v835
      %v840 = vsel %vm838, %v835, %v837
      %v843 = vmul.f32 %v827, %v839
      %v844 = vmul.f32 %v827, %v840
      %v845 = vadd.f32 %v809, %v843
      %v846 = vadd.f32 %v810, %v844
      %v847 = vld [vmem:[#allocation2 + $0x4] sm:$0xff]
      %v848 = vld [vmem:[#allocation2 + $0xc] sm:$0xf]
      %849 = vset.pattern.permute.xlu0 38
      %850 = vperm.xlu0 %849, %v148
      %v851 = vpop.permute.xlu0 %850
      %v855 = vcombine.high %v847, %v847
      %856 = vrot.lane.b32.xlu0 %v847, 96
      %v857 = vpop.permute.xlu0 %856
      %858 = vrot.lane.b32.xlu0 %v855, 96
      %v859 = vpop.permute.xlu0 %858
      %860 = vrot.lane.b32.xlu0 %v848, 96
      %v861 = vpop.permute.xlu0 %860
      %vm862 = vcmask 785408
      %v863 = vsel %vm862, %v857, %v859
      %v864 = vsel %vm862, %v859, %v861
      %v867 = vmul.f32 %v851, %v863
      %v868 = vmul.f32 %v851, %v864
      %v869 = vadd.f32 %v821, %v867
      %v870 = vadd.f32 %v822, %v868
      %v871 = vld [vmem:[#allocation2 + $0x4] sm:$0xff]
      %v872 = vld [vmem:[#allocation2 + $0xc] sm:$0xf]
      %873 = vset.pattern.permute.xlu0 45
      %874 = vperm.xlu0 %873, %v148
      %v875 = vpop.permute.xlu0 %874
      %v879 = vcombine.high %v871, %v871
      %880 = vrot.lane.b32.xlu0 %v871, 80
      %v881 = vpop.permute.xlu0 %880
      %882 = vrot.lane.b32.xlu0 %v879, 80
      %v883 = vpop.permute.xlu0 %882
      %884 = vrot.lane.b32.xlu0 %v872, 80
      %v885 = vpop.permute.xlu0 %884
      %vm886 = vcmask 654336
      %v887 = vsel %vm886, %v881, %v883
      %v888 = vsel %vm886, %v883, %v885
      %v891 = vmul.f32 %v875, %v887
      %v892 = vmul.f32 %v875, %v888
      %v893 = vadd.f32 %v845, %v891
      %v894 = vadd.f32 %v846, %v892
      %v895 = vadd.f32 %v893, %v869
      %v896 = vadd.f32 %v894, %v870
      %v897 = vmul.f32 %v737, %v895
      %v898 = vmul.f32 %v738, %v896
      %v899 = vadd.f32 %v727, %v897
      %v900 = vadd.f32 %v728, %v898
      %vm901 = vcmp.ge.s32.totalorder %v174, 4294967295
      %vm902 = vcmp.ge.s32.totalorder %v175, 4294967295
      %vm903 = vcmp.lt.s32.totalorder %v174, 15
      %vm904 = vcmp.lt.s32.totalorder %v175, 15
      %vm905 = vmand %vm901, %vm903
      %vm906 = vmand %vm902, %vm904
      %v907 = vsel %vm905, 1, 0
      %v908 = vsel %vm906, 1, 0
      %v909 = vcvt.s32.f32 %v907
      %v910 = vcvt.s32.f32 %v908
      %v911 = vld [vmem:[#allocation2] sm:$0xff]
      %v912 = vld [vmem:[#allocation2 + $0x8] sm:$0xf]
      %913 = vset.pattern.permute.xlu0 4
      %914 = vperm.xlu0 %913, %v148
      %v915 = vpop.permute.xlu0 %914
      %v919 = vcombine.high %v911, %v911
      %920 = vrot.lane.b32.xlu0 %v911, 47
      %v921 = vpop.permute.xlu0 %920
      %922 = vrot.lane.b32.xlu0 %v919, 47
      %v923 = vpop.permute.xlu0 %922
      %924 = vrot.lane.b32.xlu0 %v912, 47
      %v925 = vpop.permute.xlu0 %924
      %vm926 = vcmask 384000
      %v927 = vsel %vm926, %v921, %v923
      %v928 = vsel %vm926, %v923, %v925
      %v931 = vmul.f32 %v915, %v927
      %v932 = vmul.f32 %v915, %v928
      %v933 = vadd.f32 %v931, 0.0
      %v934 = vadd.f32 %v932, 0.0
      %v935 = vld [vmem:[#allocation2] sm:$0xff]
      %v936 = vld [vmem:[#allocation2 + $0x8] sm:$0xf]
      %937 = vset.pattern.permute.xlu0 11
      %938 = vperm.xlu0 %937, %v148
      %v939 = vpop.permute.xlu0 %938
      %v943 = vcombine.high %v935, %v935
      %944 = vrot.lane.b32.xlu0 %v935, 31
      %v945 = vpop.permute.xlu0 %944
      %946 = vrot.lane.b32.xlu0 %v943, 31
      %v947 = vpop.permute.xlu0 %946
      %948 = vrot.lane.b32.xlu0 %v936, 31
      %v949 = vpop.permute.xlu0 %948
      %vm950 = vcmask 252928
      %v951 = vsel %vm950, %v945, %v947
      %v952 = vsel %vm950, %v947, %v949
      %v955 = vmul.f32 %v939, %v951
      %v956 = vmul.f32 %v939, %v952
      %v957 = vadd.f32 %v955, 0.0
      %v958 = vadd.f32 %v956, 0.0
      %v959 = vld [vmem:[#allocation2] sm:$0xff]
      %v960 = vld [vmem:[#allocation2 + $0x8] sm:$0xf]
      %961 = vset.pattern.permute.xlu0 18
      %962 = vperm.xlu0 %961, %v148
      %v963 = vpop.permute.xlu0 %962
      %v967 = vcombine.high %v959, %v959
      %968 = vrot.lane.b32.xlu0 %v959, 15
      %v969 = vpop.permute.xlu0 %968
      %970 = vrot.lane.b32.xlu0 %v967, 15
      %v971 = vpop.permute.xlu0 %970
      %972 = vrot.lane.b32.xlu0 %v960, 15
      %v973 = vpop.permute.xlu0 %972
      %vm974 = vcmask 121856
      %v975 = vsel %vm974, %v969, %v971
      %v976 = vsel %vm974, %v971, %v973
      %v979 = vmul.f32 %v963, %v975
      %v980 = vmul.f32 %v963, %v976
      %v981 = vadd.f32 %v933, %v979
      %v982 = vadd.f32 %v934, %v980
      %v983 = vld [vmem:[#allocation2 + $0x4] sm:$0xff]
      %v984 = vld [vmem:[#allocation2 + $0xc] sm:$0xf]
      %985 = vset.pattern.permute.xlu0 25
      %986 = vperm.xlu0 %985, %v148
      %v987 = vpop.permute.xlu0 %986
      %v991 = vcombine.high %v983, %v983
      %992 = vrot.lane.b32.xlu0 %v983, 127
      %v993 = vpop.permute.xlu0 %992
      %994 = vrot.lane.b32.xlu0 %v991, 127
      %v995 = vpop.permute.xlu0 %994
      %996 = vrot.lane.b32.xlu0 %v984, 127
      %v997 = vpop.permute.xlu0 %996
      %vm998 = vcmask 1039360
      %v999 = vsel %vm998, %v993, %v995
      %v1000 = vsel %vm998, %v995, %v997
      %v1003 = vmul.f32 %v987, %v999
      %v1004 = vmul.f32 %v987, %v1000
      %v1005 = vadd.f32 %v957, %v1003
      %v1006 = vadd.f32 %v958, %v1004
      %v1007 = vld [vmem:[#allocation2 + $0x4] sm:$0xff]
      %v1008 = vld [vmem:[#allocation2 + $0xc] sm:$0xf]
      %1009 = vset.pattern.permute.xlu0 32
      %1010 = vperm.xlu0 %1009, %v148
      %v1011 = vpop.permute.xlu0 %1010
      %v1015 = vcombine.high %v1007, %v1007
      %1016 = vrot.lane.b32.xlu0 %v1007, 111
      %v1017 = vpop.permute.xlu0 %1016
      %1018 = vrot.lane.b32.xlu0 %v1015, 111
      %v1019 = vpop.permute.xlu0 %1018
      %1020 = vrot.lane.b32.xlu0 %v1008, 111
      %v1021 = vpop.permute.xlu0 %1020
      %vm1022 = vcmask 908288
      %v1023 = vsel %vm1022, %v1017, %v1019
      %v1024 = vsel %vm1022, %v1019, %v1021
      %v1027 = vmul.f32 %v1011, %v1023
      %v1028 = vmul.f32 %v1011, %v1024
      %v1029 = vadd.f32 %v981, %v1027
      %v1030 = vadd.f32 %v982, %v1028
      %v1031 = vld [vmem:[#allocation2 + $0x4] sm:$0xff]
      %v1032 = vld [vmem:[#allocation2 + $0xc] sm:$0xf]
      %1033 = vset.pattern.permute.xlu0 39
      %1034 = vperm.xlu0 %1033, %v148
      %v1035 = vpop.permute.xlu0 %1034
      %v1039 = vcombine.high %v1031, %v1031
      %1040 = vrot.lane.b32.xlu0 %v1031, 95
      %v1041 = vpop.permute.xlu0 %1040
      %1042 = vrot.lane.b32.xlu0 %v1039, 95
      %v1043 = vpop.permute.xlu0 %1042
      %1044 = vrot.lane.b32.xlu0 %v1032, 95
      %v1045 = vpop.permute.xlu0 %1044
      %vm1046 = vcmask 777216
      %v1047 = vsel %vm1046, %v1041, %v1043
      %v1048 = vsel %vm1046, %v1043, %v1045
      %v1051 = vmul.f32 %v1035, %v1047
      %v1052 = vmul.f32 %v1035, %v1048
      %v1053 = vadd.f32 %v1005, %v1051
      %v1054 = vadd.f32 %v1006, %v1052
      %v1055 = vld [vmem:[#allocation2 + $0x4] sm:$0xff]
      %v1056 = vld [vmem:[#allocation2 + $0xc] sm:$0xf]
      %1057 = vset.pattern.permute.xlu0 46
      %1058 = vperm.xlu0 %1057, %v148
      %v1059 = vpop.permute.xlu0 %1058
      %v1063 = vcombine.high %v1055, %v1055
      %1064 = vrot.lane.b32.xlu0 %v1055, 79
      %v1065 = vpop.permute.xlu0 %1064
      %1066 = vrot.lane.b32.xlu0 %v1063, 79
      %v1067 = vpop.permute.xlu0 %1066
      %1068 = vrot.lane.b32.xlu0 %v1056, 79
      %v1069 = vpop.permute.xlu0 %1068
      %vm1070 = vcmask 646144
      %v1071 = vsel %vm1070, %v1065, %v1067
      %v1072 = vsel %vm1070, %v1067, %v1069
      %v1075 = vmul.f32 %v1059, %v1071
      %v1076 = vmul.f32 %v1059, %v1072
      %v1077 = vadd.f32 %v1029, %v1075
      %v1078 = vadd.f32 %v1030, %v1076
      %v1079 = vadd.f32 %v1077, %v1053
      %v1080 = vadd.f32 %v1078, %v1054
      %v1081 = vmul.f32 %v909, %v1079
      %v1082 = vmul.f32 %v910, %v1080
      %v1083 = vadd.f32 %v899, %v1081
      %v1084 = vadd.f32 %v900, %v1082
      %vm1085 = vcmp.ge.s32.totalorder %v174, 4294967294
      %vm1086 = vcmp.ge.s32.totalorder %v175, 4294967294
      %vm1087 = vcmp.lt.s32.totalorder %v174, 14
      %vm1088 = vcmp.lt.s32.totalorder %v175, 14
      %vm1089 = vmand %vm1085, %vm1087
      %vm1090 = vmand %vm1086, %vm1088
      %v1091 = vsel %vm1089, 1, 0
      %v1092 = vsel %vm1090, 1, 0
      %v1093 = vcvt.s32.f32 %v1091
      %v1094 = vcvt.s32.f32 %v1092
      %v1095 = vld [vmem:[#allocation2] sm:$0xff]
      %v1096 = vld [vmem:[#allocation2 + $0x8] sm:$0xf]
      %1097 = vset.pattern.permute.xlu0 5
      %1098 = vperm.xlu0 %1097, %v148
      %v1099 = vpop.permute.xlu0 %1098
      %v1103 = vcombine.high %v1095, %v1095
      %1104 = vrot.lane.b32.xlu0 %v1095, 46
      %v1105 = vpop.permute.xlu0 %1104
      %1106 = vrot.lane.b32.xlu0 %v1103, 46
      %v1107 = vpop.permute.xlu0 %1106
      %1108 = vrot.lane.b32.xlu0 %v1096, 46
      %v1109 = vpop.permute.xlu0 %1108
      %vm1110 = vcmask 375808
      %v1111 = vsel %vm1110, %v1105, %v1107
      %v1112 = vsel %vm1110, %v1107, %v1109
      %v1115 = vmul.f32 %v1099, %v1111
      %v1116 = vmul.f32 %v1099, %v1112
      %v1117 = vadd.f32 %v1115, 0.0
      %v1118 = vadd.f32 %v1116, 0.0
      %v1119 = vld [vmem:[#allocation2] sm:$0xff]
      %v1120 = vld [vmem:[#allocation2 + $0x8] sm:$0xf]
      %1121 = vset.pattern.permute.xlu0 12
      %1122 = vperm.xlu0 %1121, %v148
      %v1123 = vpop.permute.xlu0 %1122
      %v1127 = vcombine.high %v1119, %v1119
      %1128 = vrot.lane.b32.xlu0 %v1119, 30
      %v1129 = vpop.permute.xlu0 %1128
      %1130 = vrot.lane.b32.xlu0 %v1127, 30
      %v1131 = vpop.permute.xlu0 %1130
      %1132 = vrot.lane.b32.xlu0 %v1120, 30
      %v1133 = vpop.permute.xlu0 %1132
      %vm1134 = vcmask 244736
      %v1135 = vsel %vm1134, %v1129, %v1131
      %v1136 = vsel %vm1134, %v1131, %v1133
      %v1139 = vmul.f32 %v1123, %v1135
      %v1140 = vmul.f32 %v1123, %v1136
      %v1141 = vadd.f32 %v1139, 0.0
      %v1142 = vadd.f32 %v1140, 0.0
      %v1143 = vld [vmem:[#allocation2] sm:$0xff]
      %v1144 = vld [vmem:[#allocation2 + $0x8] sm:$0xf]
      %1145 = vset.pattern.permute.xlu0 19
      %1146 = vperm.xlu0 %1145, %v148
      %v1147 = vpop.permute.xlu0 %1146
      %v1151 = vcombine.high %v1143, %v1143
      %1152 = vrot.lane.b32.xlu0 %v1143, 14
      %v1153 = vpop.permute.xlu0 %1152
      %1154 = vrot.lane.b32.xlu0 %v1151, 14
      %v1155 = vpop.permute.xlu0 %1154
      %1156 = vrot.lane.b32.xlu0 %v1144, 14
      %v1157 = vpop.permute.xlu0 %1156
      %vm1158 = vcmask 113664
      %v1159 = vsel %vm1158, %v1153, %v1155
      %v1160 = vsel %vm1158, %v1155, %v1157
      %v1163 = vmul.f32 %v1147, %v1159
      %v1164 = vmul.f32 %v1147, %v1160
      %v1165 = vadd.f32 %v1117, %v1163
      %v1166 = vadd.f32 %v1118, %v1164
      %v1167 = vld [vmem:[#allocation2 + $0x4] sm:$0xff]
      %v1168 = vld [vmem:[#allocation2 + $0xc] sm:$0xf]
      %1169 = vset.pattern.permute.xlu0 26
      %1170 = vperm.xlu0 %1169, %v148
      %v1171 = vpop.permute.xlu0 %1170
      %v1175 = vcombine.high %v1167, %v1167
      %1176 = vrot.lane.b32.xlu0 %v1167, 126
      %v1177 = vpop.permute.xlu0 %1176
      %1178 = vrot.lane.b32.xlu0 %v1175, 126
      %v1179 = vpop.permute.xlu0 %1178
      %1180 = vrot.lane.b32.xlu0 %v1168, 126
      %v1181 = vpop.permute.xlu0 %1180
      %vm1182 = vcmask 1031168
      %v1183 = vsel %vm1182, %v1177, %v1179
      %v1184 = vsel %vm1182, %v1179, %v1181
      %v1187 = vmul.f32 %v1171, %v1183
      %v1188 = vmul.f32 %v1171, %v1184
      %v1189 = vadd.f32 %v1141, %v1187
      %v1190 = vadd.f32 %v1142, %v1188
      %v1191 = vld [vmem:[#allocation2 + $0x4] sm:$0xff]
      %v1192 = vld [vmem:[#allocation2 + $0xc] sm:$0xf]
      %1193 = vset.pattern.permute.xlu0 33
      %1194 = vperm.xlu0 %1193, %v148
      %v1195 = vpop.permute.xlu0 %1194
      %v1199 = vcombine.high %v1191, %v1191
      %1200 = vrot.lane.b32.xlu0 %v1191, 110
      %v1201 = vpop.permute.xlu0 %1200
      %1202 = vrot.lane.b32.xlu0 %v1199, 110
      %v1203 = vpop.permute.xlu0 %1202
      %1204 = vrot.lane.b32.xlu0 %v1192, 110
      %v1205 = vpop.permute.xlu0 %1204
      %vm1206 = vcmask 900096
      %v1207 = vsel %vm1206, %v1201, %v1203
      %v1208 = vsel %vm1206, %v1203, %v1205
      %v1211 = vmul.f32 %v1195, %v1207
      %v1212 = vmul.f32 %v1195, %v1208
      %v1213 = vadd.f32 %v1165, %v1211
      %v1214 = vadd.f32 %v1166, %v1212
      %v1215 = vld [vmem:[#allocation2 + $0x4] sm:$0xff]
      %v1216 = vld [vmem:[#allocation2 + $0xc] sm:$0xf]
      %1217 = vset.pattern.permute.xlu0 40
      %1218 = vperm.xlu0 %1217, %v148
      %v1219 = vpop.permute.xlu0 %1218
      %v1223 = vcombine.high %v1215, %v1215
      %1224 = vrot.lane.b32.xlu0 %v1215, 94
      %v1225 = vpop.permute.xlu0 %1224
      %1226 = vrot.lane.b32.xlu0 %v1223, 94
      %v1227 = vpop.permute.xlu0 %1226
      %1228 = vrot.lane.b32.xlu0 %v1216, 94
      %v1229 = vpop.permute.xlu0 %1228
      %vm1230 = vcmask 769024
      %v1231 = vsel %vm1230, %v1225, %v1227
      %v1232 = vsel %vm1230, %v1227, %v1229
      %v1235 = vmul.f32 %v1219, %v1231
      %v1236 = vmul.f32 %v1219, %v1232
      %v1237 = vadd.f32 %v1189, %v1235
      %v1238 = vadd.f32 %v1190, %v1236
      %v1239 = vld [vmem:[#allocation2 + $0x4] sm:$0xff]
      %v1240 = vld [vmem:[#allocation2 + $0xc] sm:$0xf]
      %1241 = vset.pattern.permute.xlu0 47
      %1242 = vperm.xlu0 %1241, %v148
      %v1243 = vpop.permute.xlu0 %1242
      %v1247 = vcombine.high %v1239, %v1239
      %1248 = vrot.lane.b32.xlu0 %v1239, 78
      %v1249 = vpop.permute.xlu0 %1248
      %1250 = vrot.lane.b32.xlu0 %v1247, 78
      %v1251 = vpop.permute.xlu0 %1250
      %1252 = vrot.lane.b32.xlu0 %v1240, 78
      %v1253 = vpop.permute.xlu0 %1252
      %vm1254 = vcmask 637952
      %v1255 = vsel %vm1254, %v1249, %v1251
      %v1256 = vsel %vm1254, %v1251, %v1253
      %v1259 = vmul.f32 %v1243, %v1255
      %v1260 = vmul.f32 %v1243, %v1256
      %v1261 = vadd.f32 %v1213, %v1259
      %v1262 = vadd.f32 %v1214, %v1260
      %v1263 = vadd.f32 %v1261, %v1237
      %v1264 = vadd.f32 %v1262, %v1238
      %v1265 = vmul.f32 %v1093, %v1263
      %v1266 = vmul.f32 %v1094, %v1264
      %v1267 = vadd.f32 %v1083, %v1265
      %v1268 = vadd.f32 %v1084, %v1266
      %vm1269 = vcmp.ge.s32.totalorder %v174, 4294967293
      %vm1270 = vcmp.ge.s32.totalorder %v175, 4294967293
      %vm1271 = vcmp.lt.s32.totalorder %v174, 13
      %vm1272 = vcmp.lt.s32.totalorder %v175, 13
      %vm1273 = vmand %vm1269, %vm1271
      %vm1274 = vmand %vm1270, %vm1272
      %v1275 = vsel %vm1273, 1, 0
      %v1276 = vsel %vm1274, 1, 0
      %v1277 = vcvt.s32.f32 %v1275
      %v1278 = vcvt.s32.f32 %v1276
      %v1279 = vld [vmem:[#allocation2] sm:$0xff]
      %v1280 = vld [vmem:[#allocation2 + $0x8] sm:$0xf]
      %1281 = vset.pattern.permute.xlu0 6
      %1282 = vperm.xlu0 %1281, %v148
      %v1283 = vpop.permute.xlu0 %1282
      %v1287 = vcombine.high %v1279, %v1279
      %1288 = vrot.lane.b32.xlu0 %v1279, 45
      %v1289 = vpop.permute.xlu0 %1288
      %1290 = vrot.lane.b32.xlu0 %v1287, 45
      %v1291 = vpop.permute.xlu0 %1290
      %1292 = vrot.lane.b32.xlu0 %v1280, 45
      %v1293 = vpop.permute.xlu0 %1292
      %vm1294 = vcmask 367616
      %v1295 = vsel %vm1294, %v1289, %v1291
      %v1296 = vsel %vm1294, %v1291, %v1293
      %v1299 = vmul.f32 %v1283, %v1295
      %v1300 = vmul.f32 %v1283, %v1296
      %v1301 = vadd.f32 %v1299, 0.0
      %v1302 = vadd.f32 %v1300, 0.0
      %v1303 = vld [vmem:[#allocation2] sm:$0xff]
      %v1304 = vld [vmem:[#allocation2 + $0x8] sm:$0xf]
      %1305 = vset.pattern.permute.xlu0 13
      %1306 = vperm.xlu0 %1305, %v148
      %v1307 = vpop.permute.xlu0 %1306
      %v1311 = vcombine.high %v1303, %v1303
      %1312 = vrot.lane.b32.xlu0 %v1303, 29
      %v1313 = vpop.permute.xlu0 %1312
      %1314 = vrot.lane.b32.xlu0 %v1311, 29
      %v1315 = vpop.permute.xlu0 %1314
      %1316 = vrot.lane.b32.xlu0 %v1304, 29
      %v1317 = vpop.permute.xlu0 %1316
      %vm1318 = vcmask 236544
      %v1319 = vsel %vm1318, %v1313, %v1315
      %v1320 = vsel %vm1318, %v1315, %v1317
      %v1323 = vmul.f32 %v1307, %v1319
      %v1324 = vmul.f32 %v1307, %v1320
      %v1325 = vadd.f32 %v1323, 0.0
      %v1326 = vadd.f32 %v1324, 0.0
      %v1327 = vld [vmem:[#allocation2] sm:$0xff]
      %v1328 = vld [vmem:[#allocation2 + $0x8] sm:$0xf]
      %1329 = vset.pattern.permute.xlu0 20
      %1330 = vperm.xlu0 %1329, %v148
      %v1331 = vpop.permute.xlu0 %1330
      %v1335 = vcombine.high %v1327, %v1327
      %1336 = vrot.lane.b32.xlu0 %v1327, 13
      %v1337 = vpop.permute.xlu0 %1336
      %1338 = vrot.lane.b32.xlu0 %v1335, 13
      %v1339 = vpop.permute.xlu0 %1338
      %1340 = vrot.lane.b32.xlu0 %v1328, 13
      %v1341 = vpop.permute.xlu0 %1340
      %vm1342 = vcmask 105472
      %v1343 = vsel %vm1342, %v1337, %v1339
      %v1344 = vsel %vm1342, %v1339, %v1341
      %v1347 = vmul.f32 %v1331, %v1343
      %v1348 = vmul.f32 %v1331, %v1344
      %v1349 = vadd.f32 %v1301, %v1347
      %v1350 = vadd.f32 %v1302, %v1348
      %v1351 = vld [vmem:[#allocation2 + $0x4] sm:$0xff]
      %v1352 = vld [vmem:[#allocation2 + $0xc] sm:$0xf]
      %1353 = vset.pattern.permute.xlu0 27
      %1354 = vperm.xlu0 %1353, %v148
      %v1355 = vpop.permute.xlu0 %1354
      %v1359 = vcombine.high %v1351, %v1351
      %1360 = vrot.lane.b32.xlu0 %v1351, 125
      %v1361 = vpop.permute.xlu0 %1360
      %1362 = vrot.lane.b32.xlu0 %v1359, 125
      %v1363 = vpop.permute.xlu0 %1362
      %1364 = vrot.lane.b32.xlu0 %v1352, 125
      %v1365 = vpop.permute.xlu0 %1364
      %vm1366 = vcmask 1022976
      %v1367 = vsel %vm1366, %v1361, %v1363
      %v1368 = vsel %vm1366, %v1363, %v1365
      %v1371 = vmul.f32 %v1355, %v1367
      %v1372 = vmul.f32 %v1355, %v1368
      %v1373 = vadd.f32 %v1325, %v1371
      %v1374 = vadd.f32 %v1326, %v1372
      %v1375 = vld [vmem:[#allocation2 + $0x4] sm:$0xff]
      %v1376 = vld [vmem:[#allocation2 + $0xc] sm:$0xf]
      %1377 = vset.pattern.permute.xlu0 34
      %1378 = vperm.xlu0 %1377, %v148
      %v1379 = vpop.permute.xlu0 %1378
      %v1383 = vcombine.high %v1375, %v1375
      %1384 = vrot.lane.b32.xlu0 %v1375, 109
      %v1385 = vpop.permute.xlu0 %1384
      %1386 = vrot.lane.b32.xlu0 %v1383, 109
      %v1387 = vpop.permute.xlu0 %1386
      %1388 = vrot.lane.b32.xlu0 %v1376, 109
      %v1389 = vpop.permute.xlu0 %1388
      %vm1390 = vcmask 891904
      %v1391 = vsel %vm1390, %v1385, %v1387
      %v1392 = vsel %vm1390, %v1387, %v1389
      %v1395 = vmul.f32 %v1379, %v1391
      %v1396 = vmul.f32 %v1379, %v1392
      %v1397 = vadd.f32 %v1349, %v1395
      %v1398 = vadd.f32 %v1350, %v1396
      %v1399 = vld [vmem:[#allocation2 + $0x4] sm:$0xff]
      %v1400 = vld [vmem:[#allocation2 + $0xc] sm:$0xf]
      %1401 = vset.pattern.permute.xlu0 41
      %1402 = vperm.xlu0 %1401, %v148
      %v1403 = vpop.permute.xlu0 %1402
      %v1407 = vcombine.high %v1399, %v1399
      %1408 = vrot.lane.b32.xlu0 %v1399, 93
      %v1409 = vpop.permute.xlu0 %1408
      %1410 = vrot.lane.b32.xlu0 %v1407, 93
      %v1411 = vpop.permute.xlu0 %1410
      %1412 = vrot.lane.b32.xlu0 %v1400, 93
      %v1413 = vpop.permute.xlu0 %1412
      %vm1414 = vcmask 760832
      %v1415 = vsel %vm1414, %v1409, %v1411
      %v1416 = vsel %vm1414, %v1411, %v1413
      %v1419 = vmul.f32 %v1403, %v1415
      %v1420 = vmul.f32 %v1403, %v1416
      %v1421 = vadd.f32 %v1373, %v1419
      %v1422 = vadd.f32 %v1374, %v1420
      %v1423 = vld [vmem:[#allocation2 + $0x4] sm:$0xff]
      %v1424 = vld [vmem:[#allocation2 + $0xc] sm:$0xf]
      %1425 = vset.pattern.permute.xlu0 48
      %1426 = vperm.xlu0 %1425, %v148
      %v1427 = vpop.permute.xlu0 %1426
      %v1431 = vcombine.high %v1423, %v1423
      %1432 = vrot.lane.b32.xlu0 %v1423, 77
      %v1433 = vpop.permute.xlu0 %1432
      %1434 = vrot.lane.b32.xlu0 %v1431, 77
      %v1435 = vpop.permute.xlu0 %1434
      %1436 = vrot.lane.b32.xlu0 %v1424, 77
      %v1437 = vpop.permute.xlu0 %1436
      %vm1438 = vcmask 629760
      %v1439 = vsel %vm1438, %v1433, %v1435
      %v1440 = vsel %vm1438, %v1435, %v1437
      %v1443 = vmul.f32 %v1427, %v1439
      %v1444 = vmul.f32 %v1427, %v1440
      %v1445 = vadd.f32 %v1397, %v1443
      %v1446 = vadd.f32 %v1398, %v1444
      %v1447 = vadd.f32 %v1445, %v1421
      %v1448 = vadd.f32 %v1446, %v1422
      %v1449 = vmul.f32 %v1277, %v1447
      %v1450 = vmul.f32 %v1278, %v1448
      %v1451 = vadd.f32 %v1267, %v1449
      %v1452 = vadd.f32 %v1268, %v1450
      %v1455 = vrot.slane %v1451, 2
      %v1456 = vrot.slane %v1452, 2
      %v1459 = vadd.f32 %v1451, %v1455
      %v1460 = vadd.f32 %v1452, %v1456
      %v1461 = vxor.u32 %v1459, 2147483648
      %v1462 = vxor.u32 %v1460, 2147483648
      %v1463 = vmul.f32 %v1461, 1.442695
      %v1464 = vpow.pop %v1463
      %v1465 = vmul.f32 %v1462, 1.442695
      %v1466 = vpow.pop %v1465
      %v1467 = vadd.f32 %v1464, 1.0
      %v1468 = vadd.f32 %v1466, 1.0
      %v1469 = vrcp.pop %v1467
      %v1470 = vmul.f32 1.0, %v1469
      %v1471 = vrcp.pop %v1468
      %v1472 = vmul.f32 1.0, %v1471
      %v1475 = vcombine.low %v1470, %v1472
      %v1477 = vunpack.c.l.s4 1966171168
      %v1478 = vunpack.c.0.s8 %v1477
      %v1479 = vlaneseq
      %v1480 = vshrl.u32 %v1479, 7
      %v1481 = vsub.s32 %v1478, %v1480
      %v1482 = vrot.slane %v1475, %v1481
      %v1483 = vcombine.high %v1482, %v1482
      %v1485 = vunpack.c.l.s4 1966171168
      %v1486 = vunpack.c.0.s8 %v1485
      %v1487 = vlaneseq
      %v1488 = vshrl.u32 %v1487, 7
      %v1489 = vsub.s32 %v1486, %v1488
      %v1490 = vrot.slane %v1482, %v1489
      %v1492 = vunpack.c.l.s4 1966171168
      %v1493 = vunpack.c.0.s8 %v1492
      %v1494 = vlaneseq
      %v1495 = vshrl.u32 %v1494, 7
      %v1496 = vsub.s32 %v1493, %v1495
      %v1497 = vrot.slane %v1483, %v1496
      %v1500 = vlaneseq
      %vm1501 = vcmp.ge.s32.totalorder %v1500, 0
      %vm1502 = vcmp.lt.s32.totalorder %v1500, 256
      %vm1503 = vmand %vm1501, %vm1502
      %1504 = vst.msk [vmem:[#allocation8] sm:$0x3] %vm1503, %v1490
      %1505 = vst.msk [vmem:[#allocation8 + $0x2] sm:$0x3] %vm1503, %v1497
    $region25: #{tpu_custom_call.1} parent=1 // pred_fallthru
      _
    // Predicated region
    $region26: #{tpu_custom_call.1} parent=1 // pred_check
      _
    $region27: #{tpu_custom_call.1} parent=1 // pred_check_branch
      %1507 = sbr.rel (0) target = $region29
    $region28: #{tpu_custom_call.1} parent=1 // pred_region
      %s1509 = ssub.s32 64, 64
      %1510 = vsyncadd [#allocation5], %s1509
      %s1511 = sshll.u32 [#allocation8], 4
      %s1512 = int_to_ptr.vmem [resolvable:$true] %s1511
      %1517 = dma.vmem_to_hbm [thread:$0]  %s1512, 64, %s2, [#allocation5], 32, 32, 2
    $region29: #{tpu_custom_call.1} parent=1 // pred_fallthru
      _
    // Predicated region
    $region30: #{tpu_custom_call.1} parent=1 // pred_check
      _
    $region31: #{tpu_custom_call.1} parent=1 // pred_check_branch
      %1519 = sbr.rel (0) target = $region33
    $region32: #{tpu_custom_call.1} parent=1 // pred_region
      %1520 = dma.done [#allocation5], 64
    $region33: #{tpu_custom_call.1} parent=1 // pred_fallthru
      _
    %1521 = vsyncpa [#allocation4], 1
    %1522 = vsyncpa [#allocation7], 1
    %1523 = vsyncpa [#allocation5], 1

</llo_original>
